<compile_context>
chip_gen: v6e
topology: v6e:2x2x1
jax: 0.10.0
libtpu: 0.0.40
codegen_flags: <defaults>
</compile_context>

<pallas_src>
import functools

import jax
import jax.numpy as jnp
from jax.experimental import pallas as pl
from jax.experimental.pallas import tpu as pltpu


HIDDEN = 384
BN_EPS = 1e-5
LEAKY_SLOPE = 0.01          # F.leaky_relu default negative_slope
LANE = 128                  # TPU lane width


def _leaky_relu(x):
    return jnp.where(x > 0, x, LEAKY_SLOPE * x)


def _batchnorm_train(h, gamma, beta, inv_b):
    """nn.BatchNorm1d training mode (biased batch stats), single pass over h.

    Folded into a per-feature affine so the (B,384) tensor only sees one
    multiply and one add."""
    s = jnp.sum(h, axis=0, keepdims=True)
    sq = jnp.sum(h * h, axis=0, keepdims=True)
    mean = s * inv_b
    var = sq * inv_b - mean * mean
    scale = gamma * jax.lax.rsqrt(var + BN_EPS)
    shift = beta - mean * scale
    return h * scale + shift


def _dropout_keep_mask(shape, seed_u32, threshold_u32):
    """Counter-based uint32 hash (murmur3 finalizer) -> boolean keep mask."""
    rows = jax.lax.broadcasted_iota(jnp.int32, shape, 0)
    cols = jax.lax.broadcasted_iota(jnp.int32, shape, 1)
    idx = (rows * shape[1] + cols).astype(jnp.uint32)
    z = idx + seed_u32 * jnp.uint32(0x9E3779B9)
    z = z ^ (z >> jnp.uint32(16))
    z = z * jnp.uint32(0x85EBCA6B)
    z = z ^ (z >> jnp.uint32(13))
    z = z * jnp.uint32(0xC2B2AE35)
    z = z ^ (z >> jnp.uint32(16))
    return z >= threshold_u32


def nn_se_kernel(seed_ref,           # SMEM (1,)  int32 dropout seed
                 x_ref,              # VMEM (B, D_in)      f32
                 w1_ref,             # VMEM (D_in, 384)    bf16
                 w2_ref,             # VMEM (384, 384)     bf16
                 w9_ref,             # VMEM (384, OUT_PAD) bf16
                 vec_ref,            # VMEM (8, 384) f32: b1,g1,be1,b2,g2,be2,b9,0
                 o_ref,              # VMEM (B, OUT_PAD)   f32
                 *, dropout_p, inv_b, out_pad):
    b1, g1, be1 = vec_ref[0:1, :], vec_ref[1:2, :], vec_ref[2:3, :]
    b2, g2, be2 = vec_ref[3:4, :], vec_ref[4:5, :], vec_ref[5:6, :]
    b9 = vec_ref[6:7, :out_pad]

    inv_b = jnp.float32(inv_b)

    # fc1 + leaky_relu  (bf16 operands, f32 accumulation on the MXU)
    h = jnp.dot(x_ref[...].astype(jnp.bfloat16), w1_ref[...],
                preferred_element_type=jnp.float32) + b1
    h = _leaky_relu(h)
    h = _batchnorm_train(h, g1, be1, inv_b)

    # fc2 + leaky_relu
    h = jnp.dot(h.astype(jnp.bfloat16), w2_ref[...],
                preferred_element_type=jnp.float32) + b2
    h = _leaky_relu(h)
    h = _batchnorm_train(h, g2, be2, inv_b)

    # dropout (training mode): Bernoulli keep-mask with prob (1-p), scaled 1/(1-p).
    # TODO(synk): PyTorch's dropout RNG stream cannot be matched bit-for-bit; an
    #             in-kernel counter-hash with the same keep probability is used.
    if dropout_p > 0.0:
        thr = jnp.uint32(min(int(round(dropout_p * 2.0 ** 32)), 2 ** 32 - 1))
        seed_u32 = seed_ref[0].astype(jnp.uint32)
        keep = _dropout_keep_mask(h.shape, seed_u32, thr)
        h = jnp.where(keep, h * jnp.float32(1.0 / (1.0 - dropout_p)),
                      jnp.float32(0.0))

    # fc9 (output layer) — lane-dense (padded to out_pad columns)
    out = jnp.dot(h.astype(jnp.bfloat16), w9_ref[...],
                  preferred_element_type=jnp.float32) + b9
    o_ref[...] = out.astype(o_ref.dtype)


def nn_se_forward(x, packed, seed, dropout_p, num_classes):
    """x: (B, input_size) f32. packed: dict from pack_params. seed: (1,) int32."""
    B = x.shape[0]
    out_pad = packed["w9"].shape[1]

    vmem = pl.BlockSpec(memory_space=pltpu.MemorySpace.VMEM)
    smem = pl.BlockSpec(memory_space=pltpu.MemorySpace.SMEM)

    kernel = functools.partial(
        nn_se_kernel,
        dropout_p=float(dropout_p),
        inv_b=1.0 / float(B),
        out_pad=out_pad,
    )

    out_padded = pl.pallas_call(
        kernel,
        out_shape=jax.ShapeDtypeStruct((B, out_pad), jnp.float32),
        in_specs=[smem, vmem, vmem, vmem, vmem, vmem],
        out_specs=vmem,
    )(seed, x, packed["w1"], packed["w2"], packed["w9"], packed["vec"])

    return out_padded[:, :num_classes]


def init_params(key, input_size, num_classes):
    """Deterministic parameter init (PyTorch-Linear-style uniform bounds).

    Weights are stored transposed vs. PyTorch, i.e. (in_features, out_features)."""
    ks = jax.random.split(key, 6)

    def linear(kw, kb, fan_in, fan_out):
        bound = 1.0 / (float(fan_in) ** 0.5)
        w = jax.random.uniform(kw, (fan_in, fan_out), jnp.float32, -bound, bound)
        b = jax.random.uniform(kb, (1, fan_out), jnp.float32, -bound, bound)
        return w, b

    w1, b1 = linear(ks[0], ks[1], input_size, HIDDEN)
    w2, b2 = linear(ks[2], ks[3], HIDDEN, HIDDEN)
    w9, b9 = linear(ks[4], ks[5], HIDDEN, num_classes)

    return {
        "w1": w1, "b1": b1,
        "g1": jnp.ones((1, HIDDEN), jnp.float32),
        "be1": jnp.zeros((1, HIDDEN), jnp.float32),
        "w2": w2, "b2": b2,
        "g2": jnp.ones((1, HIDDEN), jnp.float32),
        "be2": jnp.zeros((1, HIDDEN), jnp.float32),
        "w9": w9, "b9": b9,
    }


def pack_params(p, num_classes):
    """Weights -> bf16 (halves HBM->VMEM weight DMA); six (1,384) vectors ->
    one (8,384) f32 slab (one aligned DMA); w9/b9 padded to 128 output lanes
    so the final store is lane-dense."""
    out_pad = max(LANE, ((num_classes + LANE - 1) // LANE) * LANE)

    w9p = jnp.zeros((HIDDEN, out_pad), jnp.float32).at[:, :num_classes].set(p["w9"])
    b9p = jnp.zeros((1, HIDDEN), jnp.float32).at[:, :num_classes].set(p["b9"])

    vec = jnp.concatenate(
        [p["b1"], p["g1"], p["be1"], p["b2"], p["g2"], p["be2"], b9p,
         jnp.zeros((1, HIDDEN), jnp.float32)],
        axis=0)                                          # (8, 384) f32

    return {
        "w1": p["w1"].astype(jnp.bfloat16),
        "w2": p["w2"].astype(jnp.bfloat16),
        "w9": w9p.astype(jnp.bfloat16),
        "vec": vec,
    }


if __name__ == "__main__":
    key = jax.random.PRNGKey(0)
    k_x, k_p = jax.random.split(key)

    batch = 16            # any multiple of 8; grow to >=128 to fill MXU rows
    input_size = 384
    num_classes = 2
    dropout_p = 0.2

    x = jax.random.normal(k_x, (batch, input_size), jnp.float32)
    raw = init_params(k_p, input_size, num_classes)
    packed = pack_params(raw, num_classes)
    seed = jnp.array([1234], dtype=jnp.int32)

    out = nn_se_forward(x, packed, seed, dropout_p, num_classes)
    out = jax.block_until_ready(out)

    assert out.shape == (batch, num_classes), out.shape
    assert bool(jnp.all(jnp.isfinite(out))), "non-finite output"
    print("KERNEL_OK")
</pallas_src>

<mosaic_0001>
module attributes {stable_mosaic.version = 11 : i64} {
  func.func @nn_se_kernel(%arg0: memref<1xi32, #tpu.memory_space<smem>>, %arg1: memref<16x384xf32, #tpu.memory_space<vmem>>, %arg2: memref<384x384xbf16, #tpu.memory_space<vmem>>, %arg3: memref<384x384xbf16, #tpu.memory_space<vmem>>, %arg4: memref<384x128xbf16, #tpu.memory_space<vmem>>, %arg5: memref<8x384xf32, #tpu.memory_space<vmem>>, %arg6: memref<16x128xf32, #tpu.memory_space<vmem>>) attributes {dimension_semantics = [], scalar_prefetch = 0 : i64, scratch_operands = 0 : i64, tpu.core_type = #tpu.core_type<tc>} {
    %c0 = arith.constant 0 : index
    %c0_0 = arith.constant 0 : index
    %0 = vector.load %arg5[%c0, %c0_0] : memref<8x384xf32, #tpu.memory_space<vmem>>, vector<1x384xf32>
    %c1 = arith.constant 1 : index
    %c0_1 = arith.constant 0 : index
    %1 = vector.load %arg5[%c1, %c0_1] : memref<8x384xf32, #tpu.memory_space<vmem>>, vector<1x384xf32>
    %c2 = arith.constant 2 : index
    %c0_2 = arith.constant 0 : index
    %2 = vector.load %arg5[%c2, %c0_2] : memref<8x384xf32, #tpu.memory_space<vmem>>, vector<1x384xf32>
    %c3 = arith.constant 3 : index
    %c0_3 = arith.constant 0 : index
    %3 = vector.load %arg5[%c3, %c0_3] : memref<8x384xf32, #tpu.memory_space<vmem>>, vector<1x384xf32>
    %c4 = arith.constant 4 : index
    %c0_4 = arith.constant 0 : index
    %4 = vector.load %arg5[%c4, %c0_4] : memref<8x384xf32, #tpu.memory_space<vmem>>, vector<1x384xf32>
    %c5 = arith.constant 5 : index
    %c0_5 = arith.constant 0 : index
    %5 = vector.load %arg5[%c5, %c0_5] : memref<8x384xf32, #tpu.memory_space<vmem>>, vector<1x384xf32>
    %c6 = arith.constant 6 : index
    %c0_6 = arith.constant 0 : index
    %6 = vector.load %arg5[%c6, %c0_6] : memref<8x384xf32, #tpu.memory_space<vmem>>, vector<1x128xf32>
    %c0_7 = arith.constant 0 : index
    %c0_8 = arith.constant 0 : index
    %7 = vector.load %arg1[%c0_7, %c0_8] : memref<16x384xf32, #tpu.memory_space<vmem>>, vector<16x384xf32>
    %8 = arith.truncf %7 : vector<16x384xf32> to vector<16x384xbf16>
    %c0_9 = arith.constant 0 : index
    %c0_10 = arith.constant 0 : index
    %9 = vector.load %arg2[%c0_9, %c0_10] : memref<384x384xbf16, #tpu.memory_space<vmem>>, vector<384x384xbf16>
    %cst = arith.constant dense<0.000000e+00> : vector<16x384xf32>
    %10 = tpu.matmul %8, %9, %cst {dimension_numbers = #tpu.dot_dimension_numbers<[1], [0], [0], [1], [0, 0, 1, 1], [], []>} : vector<16x384xbf16>, vector<384x384xbf16>, vector<16x384xf32> -> vector<16x384xf32>
    %11 = vector.broadcast %0 : vector<1x384xf32> to vector<16x384xf32>
    %12 = arith.addf %10, %11 : vector<16x384xf32>
    %cst_11 = arith.constant 0.000000e+00 : f32
    %13 = vector.broadcast %cst_11 : f32 to vector<16x384xf32>
    %14 = arith.cmpf ogt, %12, %13 : vector<16x384xf32>
    %cst_12 = arith.constant 0.00999999977 : f32
    %15 = vector.broadcast %cst_12 : f32 to vector<16x384xf32>
    %16 = arith.mulf %15, %12 : vector<16x384xf32>
    %17 = arith.select %14, %12, %16 : vector<16x384xi1>, vector<16x384xf32>
    %cst_13 = arith.constant dense<0.000000e+00> : vector<384xf32>
    %18 = vector.multi_reduction <add>, %17, %cst_13 [0] : vector<16x384xf32> to vector<384xf32>
    %19 = vector.shape_cast %18 : vector<384xf32> to vector<1x384xf32>
    %20 = arith.mulf %17, %17 : vector<16x384xf32>
    %cst_14 = arith.constant dense<0.000000e+00> : vector<384xf32>
    %21 = vector.multi_reduction <add>, %20, %cst_14 [0] : vector<16x384xf32> to vector<384xf32>
    %22 = vector.shape_cast %21 : vector<384xf32> to vector<1x384xf32>
    %cst_15 = arith.constant 6.250000e-02 : f32
    %23 = vector.broadcast %cst_15 : f32 to vector<1x384xf32>
    %24 = arith.mulf %19, %23 : vector<1x384xf32>
    %cst_16 = arith.constant 6.250000e-02 : f32
    %25 = vector.broadcast %cst_16 : f32 to vector<1x384xf32>
    %26 = arith.mulf %22, %25 : vector<1x384xf32>
    %27 = arith.mulf %24, %24 : vector<1x384xf32>
    %28 = arith.subf %26, %27 : vector<1x384xf32>
    %cst_17 = arith.constant 9.99999974E-6 : f32
    %29 = vector.broadcast %cst_17 : f32 to vector<1x384xf32>
    %30 = arith.addf %28, %29 : vector<1x384xf32>
    %31 = math.rsqrt %30 : vector<1x384xf32>
    %32 = arith.mulf %1, %31 : vector<1x384xf32>
    %33 = arith.mulf %24, %32 : vector<1x384xf32>
    %34 = arith.subf %2, %33 : vector<1x384xf32>
    %35 = vector.broadcast %32 : vector<1x384xf32> to vector<16x384xf32>
    %36 = arith.mulf %17, %35 : vector<16x384xf32>
    %37 = vector.broadcast %34 : vector<1x384xf32> to vector<16x384xf32>
    %38 = arith.addf %36, %37 : vector<16x384xf32>
    %39 = arith.truncf %38 : vector<16x384xf32> to vector<16x384xbf16>
    %c0_18 = arith.constant 0 : index
    %c0_19 = arith.constant 0 : index
    %40 = vector.load %arg3[%c0_18, %c0_19] : memref<384x384xbf16, #tpu.memory_space<vmem>>, vector<384x384xbf16>
    %cst_20 = arith.constant dense<0.000000e+00> : vector<16x384xf32>
    %41 = tpu.matmul %39, %40, %cst_20 {dimension_numbers = #tpu.dot_dimension_numbers<[1], [0], [0], [1], [0, 0, 1, 1], [], []>} : vector<16x384xbf16>, vector<384x384xbf16>, vector<16x384xf32> -> vector<16x384xf32>
    %42 = vector.broadcast %3 : vector<1x384xf32> to vector<16x384xf32>
    %43 = arith.addf %41, %42 : vector<16x384xf32>
    %cst_21 = arith.constant 0.000000e+00 : f32
    %44 = vector.broadcast %cst_21 : f32 to vector<16x384xf32>
    %45 = arith.cmpf ogt, %43, %44 : vector<16x384xf32>
    %cst_22 = arith.constant 0.00999999977 : f32
    %46 = vector.broadcast %cst_22 : f32 to vector<16x384xf32>
    %47 = arith.mulf %46, %43 : vector<16x384xf32>
    %48 = arith.select %45, %43, %47 : vector<16x384xi1>, vector<16x384xf32>
    %cst_23 = arith.constant dense<0.000000e+00> : vector<384xf32>
    %49 = vector.multi_reduction <add>, %48, %cst_23 [0] : vector<16x384xf32> to vector<384xf32>
    %50 = vector.shape_cast %49 : vector<384xf32> to vector<1x384xf32>
    %51 = arith.mulf %48, %48 : vector<16x384xf32>
    %cst_24 = arith.constant dense<0.000000e+00> : vector<384xf32>
    %52 = vector.multi_reduction <add>, %51, %cst_24 [0] : vector<16x384xf32> to vector<384xf32>
    %53 = vector.shape_cast %52 : vector<384xf32> to vector<1x384xf32>
    %cst_25 = arith.constant 6.250000e-02 : f32
    %54 = vector.broadcast %cst_25 : f32 to vector<1x384xf32>
    %55 = arith.mulf %50, %54 : vector<1x384xf32>
    %cst_26 = arith.constant 6.250000e-02 : f32
    %56 = vector.broadcast %cst_26 : f32 to vector<1x384xf32>
    %57 = arith.mulf %53, %56 : vector<1x384xf32>
    %58 = arith.mulf %55, %55 : vector<1x384xf32>
    %59 = arith.subf %57, %58 : vector<1x384xf32>
    %cst_27 = arith.constant 9.99999974E-6 : f32
    %60 = vector.broadcast %cst_27 : f32 to vector<1x384xf32>
    %61 = arith.addf %59, %60 : vector<1x384xf32>
    %62 = math.rsqrt %61 : vector<1x384xf32>
    %63 = arith.mulf %4, %62 : vector<1x384xf32>
    %64 = arith.mulf %55, %63 : vector<1x384xf32>
    %65 = arith.subf %5, %64 : vector<1x384xf32>
    %66 = vector.broadcast %63 : vector<1x384xf32> to vector<16x384xf32>
    %67 = arith.mulf %48, %66 : vector<16x384xf32>
    %68 = vector.broadcast %65 : vector<1x384xf32> to vector<16x384xf32>
    %69 = arith.addf %67, %68 : vector<16x384xf32>
    %c0_28 = arith.constant 0 : index
    %70 = memref.load %arg0[%c0_28] : memref<1xi32, #tpu.memory_space<smem>>
    %71 = tpu.iota {dimensions = array<i32: 0>} : vector<16x384xi32>
    %72 = tpu.iota {dimensions = array<i32: 1>} : vector<16x384xi32>
    %c384_i32 = arith.constant 384 : i32
    %73 = vector.broadcast %c384_i32 : i32 to vector<16x384xi32>
    %74 = arith.muli %71, %73 : vector<16x384xi32>
    %75 = arith.addi %74, %72 : vector<16x384xi32>
    %c-1640531527_i32 = arith.constant -1640531527 : i32
    %76 = arith.muli %70, %c-1640531527_i32 : i32
    %77 = vector.broadcast %76 : i32 to vector<16x384xi32>
    %78 = arith.addi %75, %77 : vector<16x384xi32>
    %c16_i32 = arith.constant 16 : i32
    %79 = vector.broadcast %c16_i32 : i32 to vector<16x384xi32>
    %80 = arith.shrui %78, %79 : vector<16x384xi32>
    %81 = arith.xori %78, %80 : vector<16x384xi32>
    %c-2048144789_i32 = arith.constant -2048144789 : i32
    %82 = vector.broadcast %c-2048144789_i32 : i32 to vector<16x384xi32>
    %83 = arith.muli %81, %82 : vector<16x384xi32>
    %c13_i32 = arith.constant 13 : i32
    %84 = vector.broadcast %c13_i32 : i32 to vector<16x384xi32>
    %85 = arith.shrui %83, %84 : vector<16x384xi32>
    %86 = arith.xori %83, %85 : vector<16x384xi32>
    %c-1028477387_i32 = arith.constant -1028477387 : i32
    %87 = vector.broadcast %c-1028477387_i32 : i32 to vector<16x384xi32>
    %88 = arith.muli %86, %87 : vector<16x384xi32>
    %c16_i32_29 = arith.constant 16 : i32
    %89 = vector.broadcast %c16_i32_29 : i32 to vector<16x384xi32>
    %90 = arith.shrui %88, %89 : vector<16x384xi32>
    %91 = arith.xori %88, %90 : vector<16x384xi32>
    %c858993459_i32 = arith.constant 858993459 : i32
    %92 = vector.broadcast %c858993459_i32 : i32 to vector<16x384xi32>
    %93 = arith.cmpi uge, %91, %92 : vector<16x384xi32>
    %cst_30 = arith.constant 1.250000e+00 : f32
    %94 = vector.broadcast %cst_30 : f32 to vector<16x384xf32>
    %95 = arith.mulf %69, %94 : vector<16x384xf32>
    %cst_31 = arith.constant 0.000000e+00 : f32
    %96 = vector.broadcast %cst_31 : f32 to vector<16x384xf32>
    %97 = arith.select %93, %95, %96 : vector<16x384xi1>, vector<16x384xf32>
    %98 = arith.truncf %97 : vector<16x384xf32> to vector<16x384xbf16>
    %c0_32 = arith.constant 0 : index
    %c0_33 = arith.constant 0 : index
    %99 = vector.load %arg4[%c0_32, %c0_33] : memref<384x128xbf16, #tpu.memory_space<vmem>>, vector<384x128xbf16>
    %cst_34 = arith.constant dense<0.000000e+00> : vector<16x128xf32>
    %100 = tpu.matmul %98, %99, %cst_34 {dimension_numbers = #tpu.dot_dimension_numbers<[1], [0], [0], [1], [0, 0, 1, 1], [], []>} : vector<16x384xbf16>, vector<384x128xbf16>, vector<16x128xf32> -> vector<16x128xf32>
    %101 = vector.broadcast %6 : vector<1x128xf32> to vector<16x128xf32>
    %102 = arith.addf %100, %101 : vector<16x128xf32>
    %c0_35 = arith.constant 0 : index
    %c0_36 = arith.constant 0 : index
    %103 = vector.load %arg6[%c0_35, %c0_36] : memref<16x128xf32, #tpu.memory_space<vmem>>, vector<16x128xf32>
    tpu.vector_store %arg6[%c0_35, %c0_36], %102 {strides = array<i32>} : memref<16x128xf32, #tpu.memory_space<vmem>>, vector<16x128xf32>,
    return
  }
}

</mosaic_0001>

<llo_original>
// kernel: tpu_custom_call.1
$region0: #{tpu_custom_call.1}
  #allocation0 [shape = 'u32[]', space=smem, size = 0x4, offset = 0x4, fixed_abs, tag = 'smem constant byte address 0x4 - core index']
  #allocation1 [shape = 'u32[144,128]{1,0:T(1,128)}', space=vmem, size = 0x12000, scoped, tag = 'internal scratch']
  #allocation2 [shape = 's32[1]{0:T(128)S(6)}', space=smem, size = 0x200, scoped, tag = 'scoped memory for tpu_custom_call.1']
  %s0 = inlined_call_operand.<no memory space> [shape: s32[1], index: 0, kind: input, shape index: {}]
  %s1 = inlined_call_operand.hbm [shape: f32[16,384], index: 1, kind: input, shape index: {}]
  %s2 = inlined_call_operand.hbm [shape: bf16[384,384], index: 2, kind: input, shape index: {}]
  %s3 = inlined_call_operand.hbm [shape: bf16[384,384], index: 3, kind: input, shape index: {}]
  %s4 = inlined_call_operand.hbm [shape: bf16[384,128], index: 4, kind: input, shape index: {}]
  %s5 = inlined_call_operand.hbm [shape: f32[8,384], index: 5, kind: input, shape index: {}]
  %s6 = inlined_call_operand.hbm [shape: f32[16,128], index: 6, kind: output, shape index: {}]
  %s7 = sld [smem:[#allocation0]]
  $region54: #{tpu_custom_call.1} parent=0
    _
  %s9 = ssub.s32 1, %s7
  %s10 = scalar_select 0, %s9, %s7
  %11 = sst [smem:[#allocation2]] %s0
  $region1: #{tpu_custom_call.1} parent=0
    #allocation3 [shape = 'u8[24576]{0}', space=vmem, size = 0x6000, scoped, tag = 'input window, operand 1, single buffered']
    #allocation4 [shape = 's32[1]{0}', space=sflag, size = 0x4, scoped, tag = 'scoped memory for tpu_custom_call.1']
    #allocation5 [shape = 's32[1]{0}', space=sflag, size = 0x4, scoped, tag = 'scoped memory for tpu_custom_call.1']
    #allocation6 [shape = 'u8[294912]{0}', space=vmem, size = 0x48000, scoped, tag = 'input window, operand 2, single buffered']
    #allocation7 [shape = 's32[1]{0}', space=sflag, size = 0x4, scoped, tag = 'scoped memory for tpu_custom_call.1']
    #allocation8 [shape = 'u8[294912]{0}', space=vmem, size = 0x48000, scoped, tag = 'input window, operand 3, single buffered']
    #allocation9 [shape = 'u8[98304]{0}', space=vmem, size = 0x18000, scoped, tag = 'input window, operand 4, single buffered']
    #allocation10 [shape = 's32[1]{0}', space=sflag, size = 0x4, scoped, tag = 'scoped memory for tpu_custom_call.1']
    #allocation11 [shape = 'u8[12288]{0}', space=vmem, size = 0x3000, scoped, tag = 'input window, operand 5, single buffered']
    #allocation12 [shape = 'u8[8192]{0}', space=vmem, size = 0x2000, scoped, tag = 'output window, operand 0, single buffered']
    %12 = vsyncpa [#allocation4], 0
    %13 = vsyncpa [#allocation7], 0
    %14 = vsyncpa [#allocation10], 0
    %15 = vsyncpa [#allocation5], 0
    // Predicated region
    $region2: #{tpu_custom_call.1} parent=1 // pred_check
      _
    $region3: #{tpu_custom_call.1} parent=1 // pred_check_branch
      %17 = sbr.rel (0) target = $region5
    $region4: #{tpu_custom_call.1} parent=1 // pred_region
      _
    $region5: #{tpu_custom_call.1} parent=1 // pred_fallthru
      _
    // Predicated region
    $region6: #{tpu_custom_call.1} parent=1 // pred_check
      _
    $region7: #{tpu_custom_call.1} parent=1 // pred_check_branch
      %19 = sbr.rel (0) target = $region9
    $region8: #{tpu_custom_call.1} parent=1 // pred_region
      %s21 = ssub.s32 768, 768
      %22 = vsyncadd [#allocation4], %s21
      %s23 = sshll.u32 [#allocation3], 4
      %s24 = int_to_ptr.vmem [resolvable:$true] %s23
      %29 = dma.hbm_to_vmem [thread:$0]  %s1, 768, %s24, [#allocation4], 384, 384, 24
    $region9: #{tpu_custom_call.1} parent=1 // pred_fallthru
      _
    // Predicated region
    $region10: #{tpu_custom_call.1} parent=1 // pred_check
      _
    $region11: #{tpu_custom_call.1} parent=1 // pred_check_branch
      %31 = sbr.rel (0) target = $region13
    $region12: #{tpu_custom_call.1} parent=1 // pred_region
      %s33 = ssub.s32 9216, 9216
      %34 = vsyncadd [#allocation7], %s33
      %s35 = sshll.u32 [#allocation6], 4
      %s36 = int_to_ptr.vmem [resolvable:$true] %s35
      %41 = dma.hbm_to_vmem [thread:$0]  %s2, 9216, %s36, [#allocation7], 192, 192, 12
    $region13: #{tpu_custom_call.1} parent=1 // pred_fallthru
      _
    // Predicated region
    $region14: #{tpu_custom_call.1} parent=1 // pred_check
      _
    $region15: #{tpu_custom_call.1} parent=1 // pred_check_branch
      %43 = sbr.rel (0) target = $region17
    $region16: #{tpu_custom_call.1} parent=1 // pred_region
      %s45 = ssub.s32 9216, 9216
      %46 = vsyncadd [#allocation7], %s45
      %s47 = sshll.u32 [#allocation8], 4
      %s48 = int_to_ptr.vmem [resolvable:$true] %s47
      %53 = dma.hbm_to_vmem [thread:$0]  %s3, 9216, %s48, [#allocation7], 192, 192, 12
    $region17: #{tpu_custom_call.1} parent=1 // pred_fallthru
      _
    // Predicated region
    $region18: #{tpu_custom_call.1} parent=1 // pred_check
      _
    $region19: #{tpu_custom_call.1} parent=1 // pred_check_branch
      %55 = sbr.rel (0) target = $region21
    $region20: #{tpu_custom_call.1} parent=1 // pred_region
      %s57 = ssub.s32 3072, 3072
      %58 = vsyncadd [#allocation10], %s57
      %s59 = sshll.u32 [#allocation9], 4
      %s60 = int_to_ptr.vmem [resolvable:$true] %s59
      %65 = dma.hbm_to_vmem [thread:$0]  %s4, 3072, %s60, [#allocation10], 64, 64, 4
    $region21: #{tpu_custom_call.1} parent=1 // pred_fallthru
      _
    // Predicated region
    $region22: #{tpu_custom_call.1} parent=1 // pred_check
      _
    $region23: #{tpu_custom_call.1} parent=1 // pred_check_branch
      %67 = sbr.rel (0) target = $region25
    $region24: #{tpu_custom_call.1} parent=1 // pred_region
      %s69 = ssub.s32 384, 384
      %70 = vsyncadd [#allocation10], %s69
      %s72 = sshll.u32 [#allocation11], 4
      %s73 = int_to_ptr.vmem [resolvable:$true] %s72
      %75 = dma.hbm_to_vmem [thread:$0]  %s5, 384, %s73, [#allocation10]
    $region25: #{tpu_custom_call.1} parent=1 // pred_fallthru
      _
    // Predicated region
    $region26: #{tpu_custom_call.1} parent=1 // pred_check
      _
    $region27: #{tpu_custom_call.1} parent=1 // pred_check_branch
      %77 = sbr.rel (0) target = $region29
    $region28: #{tpu_custom_call.1} parent=1 // pred_region
      %78 = dma.done [#allocation4], 768
    $region29: #{tpu_custom_call.1} parent=1 // pred_fallthru
      _
    // Predicated region
    $region30: #{tpu_custom_call.1} parent=1 // pred_check
      _
    $region31: #{tpu_custom_call.1} parent=1 // pred_check_branch
      %80 = sbr.rel (0) target = $region33
    $region32: #{tpu_custom_call.1} parent=1 // pred_region
      %81 = dma.done [#allocation7], 9216
    $region33: #{tpu_custom_call.1} parent=1 // pred_fallthru
      _
    // Predicated region
    $region34: #{tpu_custom_call.1} parent=1 // pred_check
      _
    $region35: #{tpu_custom_call.1} parent=1 // pred_check_branch
      %83 = sbr.rel (0) target = $region37
    $region36: #{tpu_custom_call.1} parent=1 // pred_region
      %84 = dma.done [#allocation7], 9216
    $region37: #{tpu_custom_call.1} parent=1 // pred_fallthru
      _
    // Predicated region
    $region38: #{tpu_custom_call.1} parent=1 // pred_check
      _
    $region39: #{tpu_custom_call.1} parent=1 // pred_check_branch
      %86 = sbr.rel (0) target = $region41
    $region40: #{tpu_custom_call.1} parent=1 // pred_region
      %87 = dma.done [#allocation10], 3072
    $region41: #{tpu_custom_call.1} parent=1 // pred_fallthru
      _
    // Predicated region
    $region42: #{tpu_custom_call.1} parent=1 // pred_check
      _
    $region43: #{tpu_custom_call.1} parent=1 // pred_check_branch
      %89 = sbr.rel (0) target = $region45
    $region44: #{tpu_custom_call.1} parent=1 // pred_region
      %90 = dma.done [#allocation10], 384
    $region45: #{tpu_custom_call.1} parent=1 // pred_fallthru
      _
    %v92 = vld [vmem:[#allocation11] ss:$8 sm:$0x7]
    %s93 = scalar_lea.vmem [#allocation11], 1
    %v94 = vld [vmem:[%s93] ss:$8 sm:$0x7]
    %s95 = scalar_lea.vmem [#allocation11], 2
    %v96 = vld [vmem:[%s95] ss:$8 sm:$0x7]
    %s97 = scalar_lea.vmem [#allocation11], 3
    %v98 = vld [vmem:[%s97] ss:$8 sm:$0x7]
    %s99 = scalar_lea.vmem [#allocation11], 4
    %v100 = vld [vmem:[%s99] ss:$8 sm:$0x7]
    %s101 = scalar_lea.vmem [#allocation11], 5
    %v102 = vld [vmem:[%s101] ss:$8 sm:$0x7]
    %v103 = vld [vmem:[#allocation11 + $0x6] ss:$0 sm:$0xff]
    %v104 = vld [vmem:[#allocation3] sm:$0xff]
    %v105 = vld [vmem:[#allocation3 + $0x8] sm:$0xff]
    %v106 = vld [vmem:[#allocation3 + $0x10] sm:$0xff]
    %v107 = vld [vmem:[#allocation3 + $0x18] sm:$0xff]
    %v108 = vld [vmem:[#allocation3 + $0x20] sm:$0xff]
    %v109 = vld [vmem:[#allocation3 + $0x28] sm:$0xff]
    %v110 = vpack.c.bf16 %v107, %v104
    %v111 = vpack.c.bf16 %v108, %v105
    %v112 = vpack.c.bf16 %v109, %v106
    %v113 = vld [vmem:[#allocation6] sm:$0xff]
    %v114 = vld [vmem:[#allocation6 + $0x8] sm:$0xf]
    %v115 = vld [vmem:[#allocation6 + $0xc] sm:$0xff]
    %v116 = vld [vmem:[#allocation6 + $0x14] sm:$0xf]
    %v117 = vld [vmem:[#allocation6 + $0x18] sm:$0xff]
    %v118 = vld [vmem:[#allocation6 + $0x20] sm:$0xf]
    %v119 = vld [vmem:[#allocation6 + $0x24] sm:$0xff]
    %v120 = vld [vmem:[#allocation6 + $0x2c] sm:$0xf]
    %v121 = vld [vmem:[#allocation6 + $0x30] sm:$0xff]
    %v122 = vld [vmem:[#allocation6 + $0x38] sm:$0xf]
    %v123 = vld [vmem:[#allocation6 + $0x3c] sm:$0xff]
    %v124 = vld [vmem:[#allocation6 + $0x44] sm:$0xf]
    %v125 = vld [vmem:[#allocation6 + $0x48] sm:$0xff]
    %v126 = vld [vmem:[#allocation6 + $0x50] sm:$0xf]
    %v127 = vld [vmem:[#allocation6 + $0x54] sm:$0xff]
    %v128 = vld [vmem:[#allocation6 + $0x5c] sm:$0xf]
    %v129 = vld [vmem:[#allocation6 + $0x60] sm:$0xff]
    %v130 = vld [vmem:[#allocation6 + $0x68] sm:$0xf]
    %v131 = vld [vmem:[#allocation6 + $0x6c] sm:$0xff]
    %v132 = vld [vmem:[#allocation6 + $0x74] sm:$0xf]
    %v133 = vld [vmem:[#allocation6 + $0x78] sm:$0xff]
    %v134 = vld [vmem:[#allocation6 + $0x80] sm:$0xf]
    %v135 = vld [vmem:[#allocation6 + $0x84] sm:$0xff]
    %v136 = vld [vmem:[#allocation6 + $0x8c] sm:$0xf]
    %v137 = vld [vmem:[#allocation6 + $0x90] sm:$0xff]
    %v138 = vld [vmem:[#allocation6 + $0x98] sm:$0xf]
    %v139 = vld [vmem:[#allocation6 + $0x9c] sm:$0xff]
    %v140 = vld [vmem:[#allocation6 + $0xa4] sm:$0xf]
    %v141 = vld [vmem:[#allocation6 + $0xa8] sm:$0xff]
    %v142 = vld [vmem:[#allocation6 + $0xb0] sm:$0xf]
    %v143 = vld [vmem:[#allocation6 + $0xb4] sm:$0xff]
    %v144 = vld [vmem:[#allocation6 + $0xbc] sm:$0xf]
    %v145 = vld [vmem:[#allocation6 + $0xc0] sm:$0xff]
    %v146 = vld [vmem:[#allocation6 + $0xc8] sm:$0xf]
    %v147 = vld [vmem:[#allocation6 + $0xcc] sm:$0xff]
    %v148 = vld [vmem:[#allocation6 + $0xd4] sm:$0xf]
    %v149 = vld [vmem:[#allocation6 + $0xd8] sm:$0xff]
    %v150 = vld [vmem:[#allocation6 + $0xe0] sm:$0xf]
    %v151 = vld [vmem:[#allocation6 + $0xe4] sm:$0xff]
    %v152 = vld [vmem:[#allocation6 + $0xec] sm:$0xf]
    %v153 = vld [vmem:[#allocation6 + $0xf0] sm:$0xff]
    %v154 = vld [vmem:[#allocation6 + $0xf8] sm:$0xf]
    %v155 = vld [vmem:[#allocation6 + $0xfc] sm:$0xff]
    %v156 = vld [vmem:[#allocation6 + $0x104] sm:$0xf]
    %v157 = vld [vmem:[#allocation6 + $0x108] sm:$0xff]
    %v158 = vld [vmem:[#allocation6 + $0x110] sm:$0xf]
    %v159 = vld [vmem:[#allocation6 + $0x114] sm:$0xff]
    %v160 = vld [vmem:[#allocation6 + $0x11c] sm:$0xf]
    %v161 = vld [vmem:[#allocation6 + $0x120] sm:$0xff]
    %v162 = vld [vmem:[#allocation6 + $0x128] sm:$0xf]
    %v163 = vld [vmem:[#allocation6 + $0x12c] sm:$0xff]
    %v164 = vld [vmem:[#allocation6 + $0x134] sm:$0xf]
    %v165 = vld [vmem:[#allocation6 + $0x138] sm:$0xff]
    %v166 = vld [vmem:[#allocation6 + $0x140] sm:$0xf]
    %v167 = vld [vmem:[#allocation6 + $0x144] sm:$0xff]
    %v168 = vld [vmem:[#allocation6 + $0x14c] sm:$0xf]
    %v169 = vld [vmem:[#allocation6 + $0x150] sm:$0xff]
    %v170 = vld [vmem:[#allocation6 + $0x158] sm:$0xf]
    %v171 = vld [vmem:[#allocation6 + $0x15c] sm:$0xff]
    %v172 = vld [vmem:[#allocation6 + $0x164] sm:$0xf]
    %v173 = vld [vmem:[#allocation6 + $0x168] sm:$0xff]
    %v174 = vld [vmem:[#allocation6 + $0x170] sm:$0xf]
    %v175 = vld [vmem:[#allocation6 + $0x174] sm:$0xff]
    %v176 = vld [vmem:[#allocation6 + $0x17c] sm:$0xf]
    %v177 = vld [vmem:[#allocation6 + $0x180] sm:$0xff]
    %v178 = vld [vmem:[#allocation6 + $0x188] sm:$0xf]
    %v179 = vld [vmem:[#allocation6 + $0x18c] sm:$0xff]
    %v180 = vld [vmem:[#allocation6 + $0x194] sm:$0xf]
    %v181 = vld [vmem:[#allocation6 + $0x198] sm:$0xff]
    %v182 = vld [vmem:[#allocation6 + $0x1a0] sm:$0xf]
    %v183 = vld [vmem:[#allocation6 + $0x1a4] sm:$0xff]
    %v184 = vld [vmem:[#allocation6 + $0x1ac] sm:$0xf]
    %v185 = vld [vmem:[#allocation6 + $0x1b0] sm:$0xff]
    %v186 = vld [vmem:[#allocation6 + $0x1b8] sm:$0xf]
    %v187 = vld [vmem:[#allocation6 + $0x1bc] sm:$0xff]
    %v188 = vld [vmem:[#allocation6 + $0x1c4] sm:$0xf]
    %v189 = vld [vmem:[#allocation6 + $0x1c8] sm:$0xff]
    %v190 = vld [vmem:[#allocation6 + $0x1d0] sm:$0xf]
    %v191 = vld [vmem:[#allocation6 + $0x1d4] sm:$0xff]
    %v192 = vld [vmem:[#allocation6 + $0x1dc] sm:$0xf]
    %v193 = vld [vmem:[#allocation6 + $0x1e0] sm:$0xff]
    %v194 = vld [vmem:[#allocation6 + $0x1e8] sm:$0xf]
    %v195 = vld [vmem:[#allocation6 + $0x1ec] sm:$0xff]
    %v196 = vld [vmem:[#allocation6 + $0x1f4] sm:$0xf]
    %v197 = vld [vmem:[#allocation6 + $0x1f8] sm:$0xff]
    %v198 = vld [vmem:[#allocation6 + $0x200] sm:$0xf]
    %v199 = vld [vmem:[#allocation6 + $0x204] sm:$0xff]
    %v200 = vld [vmem:[#allocation6 + $0x20c] sm:$0xf]
    %v201 = vld [vmem:[#allocation6 + $0x210] sm:$0xff]
    %v202 = vld [vmem:[#allocation6 + $0x218] sm:$0xf]
    %v203 = vld [vmem:[#allocation6 + $0x21c] sm:$0xff]
    %v204 = vld [vmem:[#allocation6 + $0x224] sm:$0xf]
    %v205 = vld [vmem:[#allocation6 + $0x228] sm:$0xff]
    %v206 = vld [vmem:[#allocation6 + $0x230] sm:$0xf]
    %v207 = vld [vmem:[#allocation6 + $0x234] sm:$0xff]
    %v208 = vld [vmem:[#allocation6 + $0x23c] sm:$0xf]
    %v210 = vlaneseq
    %v211 = vshrl.u32 %v210, 7
    %v212 = vsub.s32 0, %v211
    %v213 = vrot.slane %v92, %v212
    %v214 = vlaneseq
    %v215 = vshrl.u32 %v214, 7
    %v216 = vsub.s32 1, %v215
    %v217 = vrot.slane %v92, %v216
    %v218 = vlaneseq
    %v219 = vshrl.u32 %v218, 7
    %v220 = vsub.s32 2, %v219
    %v221 = vrot.slane %v92, %v220
    %v321 = vunpack.c.l.b16 %v113
    %v322 = vunpack.c.h.b16 %v113
    %v323 = vunpack.c.l.b16 %v114
    %v324 = vunpack.c.l.b16 %v115
    %v325 = vunpack.c.h.b16 %v115
    %v326 = vunpack.c.l.b16 %v116
    %v327 = vunpack.c.l.b16 %v117
    %v328 = vunpack.c.h.b16 %v117
    %v329 = vunpack.c.l.b16 %v118
    %v330 = vunpack.c.l.b16 %v119
    %v331 = vunpack.c.h.b16 %v119
    %v332 = vunpack.c.l.b16 %v120
    %v333 = vunpack.c.l.b16 %v121
    %v334 = vunpack.c.h.b16 %v121
    %v335 = vunpack.c.l.b16 %v122
    %v336 = vunpack.c.l.b16 %v123
    %v337 = vunpack.c.h.b16 %v123
    %v338 = vunpack.c.l.b16 %v124
    %v339 = vunpack.c.l.b16 %v125
    %v340 = vunpack.c.h.b16 %v125
    %v341 = vunpack.c.l.b16 %v126
    %v342 = vunpack.c.l.b16 %v127
    %v343 = vunpack.c.h.b16 %v127
    %v344 = vunpack.c.l.b16 %v128
    %v345 = vunpack.c.l.b16 %v129
    %v346 = vunpack.c.h.b16 %v129
    %v347 = vunpack.c.l.b16 %v130
    %v348 = vunpack.c.l.b16 %v131
    %v349 = vunpack.c.h.b16 %v131
    %v350 = vunpack.c.l.b16 %v132
    %v351 = vunpack.c.l.b16 %v133
    %v352 = vunpack.c.h.b16 %v133
    %v353 = vunpack.c.l.b16 %v134
    %v354 = vunpack.c.l.b16 %v135
    %v355 = vunpack.c.h.b16 %v135
    %v356 = vunpack.c.l.b16 %v136
    %v357 = vunpack.c.l.b16 %v137
    %v358 = vunpack.c.h.b16 %v137
    %v359 = vunpack.c.l.b16 %v138
    %v360 = vunpack.c.l.b16 %v139
    %v361 = vunpack.c.h.b16 %v139
    %v362 = vunpack.c.l.b16 %v140
    %v363 = vunpack.c.l.b16 %v141
    %v364 = vunpack.c.h.b16 %v141
    %v365 = vunpack.c.l.b16 %v142
    %v366 = vunpack.c.l.b16 %v143
    %v367 = vunpack.c.h.b16 %v143
    %v368 = vunpack.c.l.b16 %v144
    %v369 = vunpack.c.l.b16 %v145
    %v370 = vunpack.c.h.b16 %v145
    %v371 = vunpack.c.l.b16 %v146
    %v372 = vunpack.c.l.b16 %v147
    %v373 = vunpack.c.h.b16 %v147
    %v374 = vunpack.c.l.b16 %v148
    %v375 = vunpack.c.l.b16 %v149
    %v376 = vunpack.c.h.b16 %v149
    %v377 = vunpack.c.l.b16 %v150
    %v378 = vunpack.c.l.b16 %v151
    %v379 = vunpack.c.h.b16 %v151
    %v380 = vunpack.c.l.b16 %v152
    %v381 = vunpack.c.l.b16 %v153
    %v382 = vunpack.c.h.b16 %v153
    %v383 = vunpack.c.l.b16 %v154
    %v384 = vunpack.c.l.b16 %v155
    %v385 = vunpack.c.h.b16 %v155
    %v386 = vunpack.c.l.b16 %v156
    %v387 = vunpack.c.l.b16 %v157
    %v388 = vunpack.c.h.b16 %v157
    %v389 = vunpack.c.l.b16 %v158
    %v390 = vunpack.c.l.b16 %v159
    %v391 = vunpack.c.h.b16 %v159
    %v392 = vunpack.c.l.b16 %v160
    %v393 = vunpack.c.l.b16 %v161
    %v394 = vunpack.c.h.b16 %v161
    %v395 = vunpack.c.l.b16 %v162
    %v396 = vunpack.c.l.b16 %v163
    %v397 = vunpack.c.h.b16 %v163
    %v398 = vunpack.c.l.b16 %v164
    %v399 = vunpack.c.l.b16 %v165
    %v400 = vunpack.c.h.b16 %v165
    %v401 = vunpack.c.l.b16 %v166
    %v402 = vunpack.c.l.b16 %v167
    %v403 = vunpack.c.h.b16 %v167
    %v404 = vunpack.c.l.b16 %v168
    %v405 = vunpack.c.l.b16 %v169
    %v406 = vunpack.c.h.b16 %v169
    %v407 = vunpack.c.l.b16 %v170
    %v408 = vunpack.c.l.b16 %v171
    %v409 = vunpack.c.h.b16 %v171
    %v410 = vunpack.c.l.b16 %v172
    %v411 = vunpack.c.l.b16 %v173
    %v412 = vunpack.c.h.b16 %v173
    %v413 = vunpack.c.l.b16 %v174
    %v414 = vunpack.c.l.b16 %v175
    %v415 = vunpack.c.h.b16 %v175
    %v416 = vunpack.c.l.b16 %v176
    %v417 = vunpack.c.l.b16 %v177
    %v418 = vunpack.c.h.b16 %v177
    %v419 = vunpack.c.l.b16 %v178
    %v420 = vunpack.c.l.b16 %v179
    %v421 = vunpack.c.h.b16 %v179
    %v422 = vunpack.c.l.b16 %v180
    %v423 = vunpack.c.l.b16 %v181
    %v424 = vunpack.c.h.b16 %v181
    %v425 = vunpack.c.l.b16 %v182
    %v426 = vunpack.c.l.b16 %v183
    %v427 = vunpack.c.h.b16 %v183
    %v428 = vunpack.c.l.b16 %v184
    %v429 = vunpack.c.l.b16 %v185
    %v430 = vunpack.c.h.b16 %v185
    %v431 = vunpack.c.l.b16 %v186
    %v432 = vunpack.c.l.b16 %v187
    %v433 = vunpack.c.h.b16 %v187
    %v434 = vunpack.c.l.b16 %v188
    %v435 = vunpack.c.l.b16 %v189
    %v436 = vunpack.c.h.b16 %v189
    %v437 = vunpack.c.l.b16 %v190
    %v438 = vunpack.c.l.b16 %v191
    %v439 = vunpack.c.h.b16 %v191
    %v440 = vunpack.c.l.b16 %v192
    %v441 = vunpack.c.l.b16 %v193
    %v442 = vunpack.c.h.b16 %v193
    %v443 = vunpack.c.l.b16 %v194
    %v444 = vunpack.c.l.b16 %v195
    %v445 = vunpack.c.h.b16 %v195
    %v446 = vunpack.c.l.b16 %v196
    %v447 = vunpack.c.l.b16 %v197
    %v448 = vunpack.c.h.b16 %v197
    %v449 = vunpack.c.l.b16 %v198
    %v450 = vunpack.c.l.b16 %v199
    %v451 = vunpack.c.h.b16 %v199
    %v452 = vunpack.c.l.b16 %v200
    %v453 = vunpack.c.l.b16 %v201
    %v454 = vunpack.c.h.b16 %v201
    %v455 = vunpack.c.l.b16 %v202
    %v456 = vunpack.c.l.b16 %v203
    %v457 = vunpack.c.h.b16 %v203
    %v458 = vunpack.c.l.b16 %v204
    %v459 = vunpack.c.l.b16 %v205
    %v460 = vunpack.c.h.b16 %v205
    %v461 = vunpack.c.l.b16 %v206
    %v462 = vunpack.c.l.b16 %v207
    %v463 = vunpack.c.h.b16 %v207
    %v464 = vunpack.c.l.b16 %v208
    %v465 = vpack.c.b16 %v324, %v321
    %v466 = vpack.c.b16 %v325, %v322
    %v467 = vpack.c.b16 %v326, %v323
    %v468 = vpack.c.b16 %v330, %v327
    %v469 = vpack.c.b16 %v331, %v328
    %v470 = vpack.c.b16 %v332, %v329
    %v471 = vpack.c.b16 %v336, %v333
    %v472 = vpack.c.b16 %v337, %v334
    %v473 = vpack.c.b16 %v338, %v335
    %v474 = vpack.c.b16 %v342, %v339
    %v475 = vpack.c.b16 %v343, %v340
    %v476 = vpack.c.b16 %v344, %v341
    %v477 = vpack.c.b16 %v348, %v345
    %v478 = vpack.c.b16 %v349, %v346
    %v479 = vpack.c.b16 %v350, %v347
    %v480 = vpack.c.b16 %v354, %v351
    %v481 = vpack.c.b16 %v355, %v352
    %v482 = vpack.c.b16 %v356, %v353
    %v483 = vpack.c.b16 %v360, %v357
    %v484 = vpack.c.b16 %v361, %v358
    %v485 = vpack.c.b16 %v362, %v359
    %v486 = vpack.c.b16 %v366, %v363
    %v487 = vpack.c.b16 %v367, %v364
    %v488 = vpack.c.b16 %v368, %v365
    %v489 = vpack.c.b16 %v372, %v369
    %v490 = vpack.c.b16 %v373, %v370
    %v491 = vpack.c.b16 %v374, %v371
    %v492 = vpack.c.b16 %v378, %v375
    %v493 = vpack.c.b16 %v379, %v376
    %v494 = vpack.c.b16 %v380, %v377
    %v495 = vpack.c.b16 %v384, %v381
    %v496 = vpack.c.b16 %v385, %v382
    %v497 = vpack.c.b16 %v386, %v383
    %v498 = vpack.c.b16 %v390, %v387
    %v499 = vpack.c.b16 %v391, %v388
    %v500 = vpack.c.b16 %v392, %v389
    %v501 = vpack.c.b16 %v396, %v393
    %v502 = vpack.c.b16 %v397, %v394
    %v503 = vpack.c.b16 %v398, %v395
    %v504 = vpack.c.b16 %v402, %v399
    %v505 = vpack.c.b16 %v403, %v400
    %v506 = vpack.c.b16 %v404, %v401
    %v507 = vpack.c.b16 %v408, %v405
    %v508 = vpack.c.b16 %v409, %v406
    %v509 = vpack.c.b16 %v410, %v407
    %v510 = vpack.c.b16 %v414, %v411
    %v511 = vpack.c.b16 %v415, %v412
    %v512 = vpack.c.b16 %v416, %v413
    %v513 = vpack.c.b16 %v420, %v417
    %v514 = vpack.c.b16 %v421, %v418
    %v515 = vpack.c.b16 %v422, %v419
    %v516 = vpack.c.b16 %v426, %v423
    %v517 = vpack.c.b16 %v427, %v424
    %v518 = vpack.c.b16 %v428, %v425
    %v519 = vpack.c.b16 %v432, %v429
    %v520 = vpack.c.b16 %v433, %v430
    %v521 = vpack.c.b16 %v434, %v431
    %v522 = vpack.c.b16 %v438, %v435
    %v523 = vpack.c.b16 %v439, %v436
    %v524 = vpack.c.b16 %v440, %v437
    %v525 = vpack.c.b16 %v444, %v441
    %v526 = vpack.c.b16 %v445, %v442
    %v527 = vpack.c.b16 %v446, %v443
    %v528 = vpack.c.b16 %v450, %v447
    %v529 = vpack.c.b16 %v451, %v448
    %v530 = vpack.c.b16 %v452, %v449
    %v531 = vpack.c.b16 %v456, %v453
    %v532 = vpack.c.b16 %v457, %v454
    %v533 = vpack.c.b16 %v458, %v455
    %v534 = vpack.c.b16 %v462, %v459
    %v535 = vpack.c.b16 %v463, %v460
    %v536 = vpack.c.b16 %v464, %v461
    %609 = vmatprep.subr.bf16.mxu0 %v487
    %610 = vmatpush1.bf16.msra.mxu0 %v486
    %611 = vmatprep.subr.bf16.mxu0 %v484
    %612 = vmatpush1.bf16.msra.mxu0 %v483
    %613 = vmatprep.subr.bf16.mxu0 %v481
    %614 = vmatpush1.bf16.msra.mxu0 %v480
    %615 = vmatprep.subr.bf16.mxu0 %v478
    %616 = vmatpush1.bf16.msra.mxu0 %v477
    %617 = vmatprep.subr.bf16.mxu0 %v475
    %618 = vmatpush1.bf16.msra.mxu0 %v474
    %619 = vmatprep.subr.bf16.mxu0 %v472
    %620 = vmatpush1.bf16.msra.mxu0 %v471
    %621 = vmatprep.subr.bf16.mxu0 %v469
    %622 = vmatpush1.bf16.msra.mxu0 %v468
    %623 = vmatprep.subr.bf16.mxu0 %v466
    %624 = vmatpush1.bf16.msra.mxu0 %v465
    %625 = vmatprep.subr.bf16.mxu0 %v511
    %626 = vmatpush2.bf16.msra.mxu0 %v510
    %627 = vmatprep.subr.bf16.mxu0 %v508
    %628 = vmatpush2.bf16.msra.mxu0 %v507
    %629 = vmatprep.subr.bf16.mxu0 %v505
    %630 = vmatpush2.bf16.msra.mxu0 %v504
    %631 = vmatprep.subr.bf16.mxu0 %v502
    %632 = vmatpush2.bf16.msra.mxu0 %v501
    %633 = vmatprep.subr.bf16.mxu0 %v499
    %634 = vmatpush2.bf16.msra.mxu0 %v498
    %635 = vmatprep.subr.bf16.mxu0 %v496
    %636 = vmatpush2.bf16.msra.mxu0 %v495
    %637 = vmatprep.subr.bf16.mxu0 %v493
    %638 = vmatpush2.bf16.msra.mxu0 %v492
    %639 = vmatprep.subr.bf16.mxu0 %v490
    %640 = vmatpush2.bf16.msra.mxu0 %v489
    %641 = vmatprep.mubr.bf16.mxu0 %v111
    %642 = vmatmul.mubr.bf16.gmra.mxu0 %v110
    %v643 = vpop.f32.mrf.mxu0
    %v644 = vadd.f32 %v213, %v643
    %v645 = vpop.f32.mrf.mxu0
    %v646 = vadd.f32 %v217, %v645
    %v647 = vpop.f32.mrf.mxu0
    %v648 = vadd.f32 %v213, %v647
    %v649 = vpop.f32.mrf.mxu0
    %v650 = vadd.f32 %v217, %v649
    %651 = vdwg.mxu0
    %652 = vmatprep.subr.bf16.mxu0 %v535
    %653 = vmatpush1.bf16.msra.mxu0 %v534
    %654 = vmatprep.subr.bf16.mxu0 %v532
    %655 = vmatpush1.bf16.msra.mxu0 %v531
    %656 = vmatprep.subr.bf16.mxu0 %v529
    %657 = vmatpush1.bf16.msra.mxu0 %v528
    %658 = vmatprep.subr.bf16.mxu0 %v526
    %659 = vmatpush1.bf16.msra.mxu0 %v525
    %660 = vmatprep.subr.bf16.mxu0 %v523
    %661 = vmatpush1.bf16.msra.mxu0 %v522
    %662 = vmatprep.subr.bf16.mxu0 %v520
    %663 = vmatpush1.bf16.msra.mxu0 %v519
    %664 = vmatprep.subr.bf16.mxu0 %v517
    %665 = vmatpush1.bf16.msra.mxu0 %v516
    %666 = vmatprep.subr.bf16.mxu0 %v514
    %667 = vmatpush1.bf16.msra.mxu0 %v513
    %668 = vmatprep.subr.bf16.mxu0 0
    %669 = vmatpush2.bf16.msra.mxu0 0
    %670 = vmatprep.subr.bf16.mxu0 0
    %671 = vmatpush2.bf16.msra.mxu0 0
    %672 = vmatprep.subr.bf16.mxu0 0
    %673 = vmatpush2.bf16.msra.mxu0 0
    %674 = vmatprep.subr.bf16.mxu0 0
    %675 = vmatpush2.bf16.msra.mxu0 0
    %676 = vmatprep.subr.bf16.mxu0 0
    %677 = vmatpush2.bf16.msra.mxu0 0
    %678 = vmatprep.subr.bf16.mxu0 0
    %679 = vmatpush2.bf16.msra.mxu0 0
    %680 = vmatprep.subr.bf16.mxu0 0
    %681 = vmatpush2.bf16.msra.mxu0 0
    %682 = vmatprep.subr.bf16.mxu0 0
    %683 = vmatpush2.bf16.msra.mxu0 0
    %684 = vmatprep.mubr.bf16.mxu0 0
    %685 = vmatmul.mubr.bf16.gmra.mxu0 %v112
    %v686 = vpop.f32.mrf.mxu0
    %v687 = vadd.f32 %v644, %v686
    %v688 = vpop.f32.mrf.mxu0
    %v689 = vadd.f32 %v646, %v688
    %v690 = vpop.f32.mrf.mxu0
    %v691 = vadd.f32 %v648, %v690
    %v692 = vpop.f32.mrf.mxu0
    %v693 = vadd.f32 %v650, %v692
    %694 = vdwg.mxu0
    %695 = vmatprep.subr.bf16.mxu0 0
    %696 = vmatpush1.bf16.msra.mxu0 %v488
    %697 = vmatprep.subr.bf16.mxu0 0
    %698 = vmatpush1.bf16.msra.mxu0 %v485
    %699 = vmatprep.subr.bf16.mxu0 0
    %700 = vmatpush1.bf16.msra.mxu0 %v482
    %701 = vmatprep.subr.bf16.mxu0 0
    %702 = vmatpush1.bf16.msra.mxu0 %v479
    %703 = vmatprep.subr.bf16.mxu0 0
    %704 = vmatpush1.bf16.msra.mxu0 %v476
    %705 = vmatprep.subr.bf16.mxu0 0
    %706 = vmatpush1.bf16.msra.mxu0 %v473
    %707 = vmatprep.subr.bf16.mxu0 0
    %708 = vmatpush1.bf16.msra.mxu0 %v470
    %709 = vmatprep.subr.bf16.mxu0 0
    %710 = vmatpush1.bf16.msra.mxu0 %v467
    %711 = vmatprep.subr.bf16.mxu0 0
    %712 = vmatpush2.bf16.msra.mxu0 %v512
    %713 = vmatprep.subr.bf16.mxu0 0
    %714 = vmatpush2.bf16.msra.mxu0 %v509
    %715 = vmatprep.subr.bf16.mxu0 0
    %716 = vmatpush2.bf16.msra.mxu0 %v506
    %717 = vmatprep.subr.bf16.mxu0 0
    %718 = vmatpush2.bf16.msra.mxu0 %v503
    %719 = vmatprep.subr.bf16.mxu0 0
    %720 = vmatpush2.bf16.msra.mxu0 %v500
    %721 = vmatprep.subr.bf16.mxu0 0
    %722 = vmatpush2.bf16.msra.mxu0 %v497
    %723 = vmatprep.subr.bf16.mxu0 0
    %724 = vmatpush2.bf16.msra.mxu0 %v494
    %725 = vmatprep.subr.bf16.mxu0 0
    %726 = vmatpush2.bf16.msra.mxu0 %v491
    %727 = vmatprep.mubr.bf16.mxu0 %v111
    %728 = vmatmul.mubr.bf16.gmra.mxu0 %v110
    %v729 = vpop.f32.mrf.mxu0
    %v730 = vadd.f32 %v221, %v729
    %v731 = vpop.f32.mrf.mxu0
    %v732 = vpop.f32.mrf.mxu0
    %v733 = vadd.f32 %v221, %v732
    %v734 = vpop.f32.mrf.mxu0
    %735 = vdwg.mxu0
    %736 = vmatprep.subr.bf16.mxu0 0
    %737 = vmatpush1.bf16.msra.mxu0 %v536
    %738 = vmatprep.subr.bf16.mxu0 0
    %739 = vmatpush1.bf16.msra.mxu0 %v533
    %740 = vmatprep.subr.bf16.mxu0 0
    %741 = vmatpush1.bf16.msra.mxu0 %v530
    %742 = vmatprep.subr.bf16.mxu0 0
    %743 = vmatpush1.bf16.msra.mxu0 %v527
    %744 = vmatprep.subr.bf16.mxu0 0
    %745 = vmatpush1.bf16.msra.mxu0 %v524
    %746 = vmatprep.subr.bf16.mxu0 0
    %747 = vmatpush1.bf16.msra.mxu0 %v521
    %748 = vmatprep.subr.bf16.mxu0 0
    %749 = vmatpush1.bf16.msra.mxu0 %v518
    %750 = vmatprep.subr.bf16.mxu0 0
    %751 = vmatpush1.bf16.msra.mxu0 %v515
    %752 = vmatprep.subr.bf16.mxu0 0
    %753 = vmatpush2.bf16.msra.mxu0 0
    %754 = vmatprep.subr.bf16.mxu0 0
    %755 = vmatpush2.bf16.msra.mxu0 0
    %756 = vmatprep.subr.bf16.mxu0 0
    %757 = vmatpush2.bf16.msra.mxu0 0
    %758 = vmatprep.subr.bf16.mxu0 0
    %759 = vmatpush2.bf16.msra.mxu0 0
    %760 = vmatprep.subr.bf16.mxu0 0
    %761 = vmatpush2.bf16.msra.mxu0 0
    %762 = vmatprep.subr.bf16.mxu0 0
    %763 = vmatpush2.bf16.msra.mxu0 0
    %764 = vmatprep.subr.bf16.mxu0 0
    %765 = vmatpush2.bf16.msra.mxu0 0
    %766 = vmatprep.subr.bf16.mxu0 0
    %767 = vmatpush2.bf16.msra.mxu0 0
    %768 = vmatprep.mubr.bf16.mxu0 0
    %769 = vmatmul.mubr.bf16.gmra.mxu0 %v112
    %v770 = vpop.f32.mrf.mxu0
    %v771 = vadd.f32 %v730, %v770
    %v772 = vpop.f32.mrf.mxu0
    %v773 = vpop.f32.mrf.mxu0
    %v774 = vadd.f32 %v733, %v773
    %v775 = vpop.f32.mrf.mxu0
    %776 = vdwg.mxu0
    %vm777 = vcmp.gt.f32.partialorder %v687, 0.0
    %vm778 = vcmp.gt.f32.partialorder %v689, 0.0
    %vm779 = vcmp.gt.f32.partialorder %v771, 0.0
    %vm780 = vcmp.gt.f32.partialorder %v691, 0.0
    %vm781 = vcmp.gt.f32.partialorder %v693, 0.0
    %vm782 = vcmp.gt.f32.partialorder %v774, 0.0
    %v783 = vmul.f32 %v687, 0.01
    %v784 = vmul.f32 %v689, 0.01
    %v785 = vmul.f32 %v771, 0.01
    %v786 = vmul.f32 %v691, 0.01
    %v787 = vmul.f32 %v693, 0.01
    %v788 = vmul.f32 %v774, 0.01
    %v789 = vsel %vm777, %v687, %v783
    %v790 = vsel %vm778, %v689, %v784
    %v791 = vsel %vm779, %v771, %v785
    %v792 = vsel %vm780, %v691, %v786
    %v793 = vsel %vm781, %v693, %v787
    %v794 = vsel %vm782, %v774, %v788
    %v795 = vadd.f32 %v789, %v792
    %v796 = vrot.slane %v795, 4
    %v797 = vadd.f32 %v795, %v796
    %v798 = vrot.slane %v797, 2
    %v799 = vadd.f32 %v797, %v798
    %v800 = vrot.slane %v799, 1
    %v801 = vadd.f32 %v799, %v800
    %v802 = vadd.f32 %v790, %v793
    %v803 = vrot.slane %v802, 4
    %v804 = vadd.f32 %v802, %v803
    %v805 = vrot.slane %v804, 2
    %v806 = vadd.f32 %v804, %v805
    %v807 = vrot.slane %v806, 1
    %v808 = vadd.f32 %v806, %v807
    %v809 = vadd.f32 %v791, %v794
    %v810 = vrot.slane %v809, 4
    %v811 = vadd.f32 %v809, %v810
    %v812 = vrot.slane %v811, 2
    %v813 = vadd.f32 %v811, %v812
    %v814 = vrot.slane %v813, 1
    %v815 = vadd.f32 %v813, %v814
    %v816 = vmul.f32 %v789, %v789
    %v817 = vmul.f32 %v790, %v790
    %v818 = vmul.f32 %v791, %v791
    %v819 = vmul.f32 %v792, %v792
    %v820 = vmul.f32 %v793, %v793
    %v821 = vmul.f32 %v794, %v794
    %v822 = vadd.f32 %v816, %v819
    %v823 = vrot.slane %v822, 4
    %v824 = vadd.f32 %v822, %v823
    %v825 = vrot.slane %v824, 2
    %v826 = vadd.f32 %v824, %v825
    %v827 = vrot.slane %v826, 1
    %v828 = vadd.f32 %v826, %v827
    %v829 = vadd.f32 %v817, %v820
    %v830 = vrot.slane %v829, 4
    %v831 = vadd.f32 %v829, %v830
    %v832 = vrot.slane %v831, 2
    %v833 = vadd.f32 %v831, %v832
    %v834 = vrot.slane %v833, 1
    %v835 = vadd.f32 %v833, %v834
    %v836 = vadd.f32 %v818, %v821
    %v837 = vrot.slane %v836, 4
    %v838 = vadd.f32 %v836, %v837
    %v839 = vrot.slane %v838, 2
    %v840 = vadd.f32 %v838, %v839
    %v841 = vrot.slane %v840, 1
    %v842 = vadd.f32 %v840, %v841
    %v843 = vmul.f32 %v801, 0.0625
    %v844 = vmul.f32 %v808, 0.0625
    %v845 = vmul.f32 %v815, 0.0625
    %v846 = vmul.f32 %v828, 0.0625
    %v847 = vmul.f32 %v835, 0.0625
    %v848 = vmul.f32 %v842, 0.0625
    %v849 = vmul.f32 %v843, %v843
    %v850 = vmul.f32 %v844, %v844
    %v851 = vmul.f32 %v845, %v845
    %v852 = vsub.f32 %v846, %v849
    %v853 = vsub.f32 %v847, %v850
    %v854 = vsub.f32 %v848, %v851
    %v855 = vadd.f32 %v852, 1e-05
    %v856 = vadd.f32 %v853, 1e-05
    %v857 = vadd.f32 %v854, 1e-05
    %v858 = vrsqrt.pop %v855
    %v859 = vrsqrt.pop %v856
    %v860 = vrsqrt.pop %v857
    %v864 = vcombine.low %v858, %v859
    %v866 = vunpack.c.l.s4 1966171168
    %v867 = vunpack.c.0.s8 %v866
    %v868 = vlaneseq
    %v869 = vshrl.u32 %v868, 7
    %v870 = vsub.s32 %v867, %v869
    %v871 = vrot.slane %v864, %v870
    %v873 = vunpack.c.l.s4 1966171168
    %v874 = vunpack.c.0.s8 %v873
    %v875 = vlaneseq
    %v876 = vshrl.u32 %v875, 7
    %v877 = vsub.s32 %v874, %v876
    %v878 = vrot.slane %v860, %v877
    %v879 = vcombine.low %v871, %v878
    %v881 = vunpack.c.l.s4 1966171168
    %v882 = vunpack.c.0.s8 %v881
    %v883 = vlaneseq
    %v884 = vshrl.u32 %v883, 7
    %v885 = vsub.s32 %v882, %v884
    %v886 = vrot.slane %v879, %v885
    %v888 = vmul.f32 %v94, %v886
    %v890 = vlaneseq
    %v891 = vshrl.u32 %v890, 7
    %v892 = vsub.s32 0, %v891
    %v893 = vrot.slane %v888, %v892
    %v894 = vlaneseq
    %v895 = vshrl.u32 %v894, 7
    %v896 = vsub.s32 1, %v895
    %v897 = vrot.slane %v888, %v896
    %v898 = vlaneseq
    %v899 = vshrl.u32 %v898, 7
    %v900 = vsub.s32 2, %v899
    %v901 = vrot.slane %v888, %v900
    %v905 = vmul.f32 %v843, %v893
    %v906 = vmul.f32 %v844, %v897
    %v907 = vmul.f32 %v845, %v901
    %v911 = vcombine.low %v905, %v906
    %v913 = vunpack.c.l.s4 1966171168
    %v914 = vunpack.c.0.s8 %v913
    %v915 = vlaneseq
    %v916 = vshrl.u32 %v915, 7
    %v917 = vsub.s32 %v914, %v916
    %v918 = vrot.slane %v911, %v917
    %v920 = vunpack.c.l.s4 1966171168
    %v921 = vunpack.c.0.s8 %v920
    %v922 = vlaneseq
    %v923 = vshrl.u32 %v922, 7
    %v924 = vsub.s32 %v921, %v923
    %v925 = vrot.slane %v907, %v924
    %v926 = vcombine.low %v918, %v925
    %v928 = vunpack.c.l.s4 1966171168
    %v929 = vunpack.c.0.s8 %v928
    %v930 = vlaneseq
    %v931 = vshrl.u32 %v930, 7
    %v932 = vsub.s32 %v929, %v931
    %v933 = vrot.slane %v926, %v932
    %v935 = vsub.f32 %v96, %v933
    %v936 = vmul.f32 %v789, %v893
    %v937 = vmul.f32 %v790, %v897
    %v938 = vmul.f32 %v791, %v901
    %v939 = vmul.f32 %v792, %v893
    %v940 = vmul.f32 %v793, %v897
    %v941 = vmul.f32 %v794, %v901
    %v943 = vlaneseq
    %v944 = vshrl.u32 %v943, 7
    %v945 = vsub.s32 0, %v944
    %v946 = vrot.slane %v935, %v945
    %v947 = vlaneseq
    %v948 = vshrl.u32 %v947, 7
    %v949 = vsub.s32 1, %v948
    %v950 = vrot.slane %v935, %v949
    %v951 = vlaneseq
    %v952 = vshrl.u32 %v951, 7
    %v953 = vsub.s32 2, %v952
    %v954 = vrot.slane %v935, %v953
    %v958 = vadd.f32 %v936, %v946
    %v959 = vadd.f32 %v937, %v950
    %v960 = vadd.f32 %v938, %v954
    %v961 = vadd.f32 %v939, %v946
    %v962 = vadd.f32 %v940, %v950
    %v963 = vadd.f32 %v941, %v954
    %v964 = vpack.c.bf16 %v961, %v958
    %v965 = vpack.c.bf16 %v962, %v959
    %v966 = vpack.c.bf16 %v963, %v960
    %v967 = vld [vmem:[#allocation8] sm:$0xff]
    %v968 = vld [vmem:[#allocation8 + $0x8] sm:$0xf]
    %v969 = vld [vmem:[#allocation8 + $0xc] sm:$0xff]
    %v970 = vld [vmem:[#allocation8 + $0x14] sm:$0xf]
    %v971 = vld [vmem:[#allocation8 + $0x18] sm:$0xff]
    %v972 = vld [vmem:[#allocation8 + $0x20] sm:$0xf]
    %v973 = vld [vmem:[#allocation8 + $0x24] sm:$0xff]
    %v974 = vld [vmem:[#allocation8 + $0x2c] sm:$0xf]
    %v975 = vld [vmem:[#allocation8 + $0x30] sm:$0xff]
    %v976 = vld [vmem:[#allocation8 + $0x38] sm:$0xf]
    %v977 = vld [vmem:[#allocation8 + $0x3c] sm:$0xff]
    %v978 = vld [vmem:[#allocation8 + $0x44] sm:$0xf]
    %v979 = vld [vmem:[#allocation8 + $0x48] sm:$0xff]
    %v980 = vld [vmem:[#allocation8 + $0x50] sm:$0xf]
    %v981 = vld [vmem:[#allocation8 + $0x54] sm:$0xff]
    %v982 = vld [vmem:[#allocation8 + $0x5c] sm:$0xf]
    %v983 = vld [vmem:[#allocation8 + $0x60] sm:$0xff]
    %v984 = vld [vmem:[#allocation8 + $0x68] sm:$0xf]
    %v985 = vld [vmem:[#allocation8 + $0x6c] sm:$0xff]
    %v986 = vld [vmem:[#allocation8 + $0x74] sm:$0xf]
    %v987 = vld [vmem:[#allocation8 + $0x78] sm:$0xff]
    %v988 = vld [vmem:[#allocation8 + $0x80] sm:$0xf]
    %v989 = vld [vmem:[#allocation8 + $0x84] sm:$0xff]
    %v990 = vld [vmem:[#allocation8 + $0x8c] sm:$0xf]
    %v991 = vld [vmem:[#allocation8 + $0x90] sm:$0xff]
    %v992 = vld [vmem:[#allocation8 + $0x98] sm:$0xf]
    %v993 = vld [vmem:[#allocation8 + $0x9c] sm:$0xff]
    %v994 = vld [vmem:[#allocation8 + $0xa4] sm:$0xf]
    %v995 = vld [vmem:[#allocation8 + $0xa8] sm:$0xff]
    %v996 = vld [vmem:[#allocation8 + $0xb0] sm:$0xf]
    %v997 = vld [vmem:[#allocation8 + $0xb4] sm:$0xff]
    %v998 = vld [vmem:[#allocation8 + $0xbc] sm:$0xf]
    %v999 = vld [vmem:[#allocation8 + $0xc0] sm:$0xff]
    %v1000 = vld [vmem:[#allocation8 + $0xc8] sm:$0xf]
    %v1001 = vld [vmem:[#allocation8 + $0xcc] sm:$0xff]
    %v1002 = vld [vmem:[#allocation8 + $0xd4] sm:$0xf]
    %v1003 = vld [vmem:[#allocation8 + $0xd8] sm:$0xff]
    %v1004 = vld [vmem:[#allocation8 + $0xe0] sm:$0xf]
    %v1005 = vld [vmem:[#allocation8 + $0xe4] sm:$0xff]
    %v1006 = vld [vmem:[#allocation8 + $0xec] sm:$0xf]
    %v1007 = vld [vmem:[#allocation8 + $0xf0] sm:$0xff]
    %v1008 = vld [vmem:[#allocation8 + $0xf8] sm:$0xf]
    %v1009 = vld [vmem:[#allocation8 + $0xfc] sm:$0xff]
    %v1010 = vld [vmem:[#allocation8 + $0x104] sm:$0xf]
    %v1011 = vld [vmem:[#allocation8 + $0x108] sm:$0xff]
    %v1012 = vld [vmem:[#allocation8 + $0x110] sm:$0xf]
    %v1013 = vld [vmem:[#allocation8 + $0x114] sm:$0xff]
    %v1014 = vld [vmem:[#allocation8 + $0x11c] sm:$0xf]
    %v1015 = vld [vmem:[#allocation8 + $0x120] sm:$0xff]
    %v1016 = vld [vmem:[#allocation8 + $0x128] sm:$0xf]
    %v1017 = vld [vmem:[#allocation8 + $0x12c] sm:$0xff]
    %v1018 = vld [vmem:[#allocation8 + $0x134] sm:$0xf]
    %v1019 = vld [vmem:[#allocation8 + $0x138] sm:$0xff]
    %v1020 = vld [vmem:[#allocation8 + $0x140] sm:$0xf]
    %v1021 = vld [vmem:[#allocation8 + $0x144] sm:$0xff]
    %v1022 = vld [vmem:[#allocation8 + $0x14c] sm:$0xf]
    %v1023 = vld [vmem:[#allocation8 + $0x150] sm:$0xff]
    %v1024 = vld [vmem:[#allocation8 + $0x158] sm:$0xf]
    %v1025 = vld [vmem:[#allocation8 + $0x15c] sm:$0xff]
    %v1026 = vld [vmem:[#allocation8 + $0x164] sm:$0xf]
    %v1027 = vld [vmem:[#allocation8 + $0x168] sm:$0xff]
    %v1028 = vld [vmem:[#allocation8 + $0x170] sm:$0xf]
    %v1029 = vld [vmem:[#allocation8 + $0x174] sm:$0xff]
    %v1030 = vld [vmem:[#allocation8 + $0x17c] sm:$0xf]
    %v1031 = vld [vmem:[#allocation8 + $0x180] sm:$0xff]
    %v1032 = vld [vmem:[#allocation8 + $0x188] sm:$0xf]
    %v1033 = vld [vmem:[#allocation8 + $0x18c] sm:$0xff]
    %v1034 = vld [vmem:[#allocation8 + $0x194] sm:$0xf]
    %v1035 = vld [vmem:[#allocation8 + $0x198] sm:$0xff]
    %v1036 = vld [vmem:[#allocation8 + $0x1a0] sm:$0xf]
    %v1037 = vld [vmem:[#allocation8 + $0x1a4] sm:$0xff]
    %v1038 = vld [vmem:[#allocation8 + $0x1ac] sm:$0xf]
    %v1039 = vld [vmem:[#allocation8 + $0x1b0] sm:$0xff]
    %v1040 = vld [vmem:[#allocation8 + $0x1b8] sm:$0xf]
    %v1041 = vld [vmem:[#allocation8 + $0x1bc] sm:$0xff]
    %v1042 = vld [vmem:[#allocation8 + $0x1c4] sm:$0xf]
    %v1043 = vld [vmem:[#allocation8 + $0x1c8] sm:$0xff]
    %v1044 = vld [vmem:[#allocation8 + $0x1d0] sm:$0xf]
    %v1045 = vld [vmem:[#allocation8 + $0x1d4] sm:$0xff]
    %v1046 = vld [vmem:[#allocation8 + $0x1dc] sm:$0xf]
    %v1047 = vld [vmem:[#allocation8 + $0x1e0] sm:$0xff]
    %v1048 = vld [vmem:[#allocation8 + $0x1e8] sm:$0xf]
    %v1049 = vld [vmem:[#allocation8 + $0x1ec] sm:$0xff]
    %v1050 = vld [vmem:[#allocation8 + $0x1f4] sm:$0xf]
    %v1051 = vld [vmem:[#allocation8 + $0x1f8] sm:$0xff]
    %v1052 = vld [vmem:[#allocation8 + $0x200] sm:$0xf]
    %v1053 = vld [vmem:[#allocation8 + $0x204] sm:$0xff]
    %v1054 = vld [vmem:[#allocation8 + $0x20c] sm:$0xf]
    %v1055 = vld [vmem:[#allocation8 + $0x210] sm:$0xff]
    %v1056 = vld [vmem:[#allocation8 + $0x218] sm:$0xf]
    %v1057 = vld [vmem:[#allocation8 + $0x21c] sm:$0xff]
    %v1058 = vld [vmem:[#allocation8 + $0x224] sm:$0xf]
    %v1059 = vld [vmem:[#allocation8 + $0x228] sm:$0xff]
    %v1060 = vld [vmem:[#allocation8 + $0x230] sm:$0xf]
    %v1061 = vld [vmem:[#allocation8 + $0x234] sm:$0xff]
    %v1062 = vld [vmem:[#allocation8 + $0x23c] sm:$0xf]
    %v1064 = vlaneseq
    %v1065 = vshrl.u32 %v1064, 7
    %v1066 = vsub.s32 0, %v1065
    %v1067 = vrot.slane %v98, %v1066
    %v1068 = vlaneseq
    %v1069 = vshrl.u32 %v1068, 7
    %v1070 = vsub.s32 1, %v1069
    %v1071 = vrot.slane %v98, %v1070
    %v1072 = vlaneseq
    %v1073 = vshrl.u32 %v1072, 7
    %v1074 = vsub.s32 2, %v1073
    %v1075 = vrot.slane %v98, %v1074
    %v1175 = vunpack.c.l.b16 %v967
    %v1176 = vunpack.c.h.b16 %v967
    %v1177 = vunpack.c.l.b16 %v968
    %v1178 = vunpack.c.l.b16 %v969
    %v1179 = vunpack.c.h.b16 %v969
    %v1180 = vunpack.c.l.b16 %v970
    %v1181 = vunpack.c.l.b16 %v971
    %v1182 = vunpack.c.h.b16 %v971
    %v1183 = vunpack.c.l.b16 %v972
    %v1184 = vunpack.c.l.b16 %v973
    %v1185 = vunpack.c.h.b16 %v973
    %v1186 = vunpack.c.l.b16 %v974
    %v1187 = vunpack.c.l.b16 %v975
    %v1188 = vunpack.c.h.b16 %v975
    %v1189 = vunpack.c.l.b16 %v976
    %v1190 = vunpack.c.l.b16 %v977
    %v1191 = vunpack.c.h.b16 %v977
    %v1192 = vunpack.c.l.b16 %v978
    %v1193 = vunpack.c.l.b16 %v979
    %v1194 = vunpack.c.h.b16 %v979
    %v1195 = vunpack.c.l.b16 %v980
    %v1196 = vunpack.c.l.b16 %v981
    %v1197 = vunpack.c.h.b16 %v981
    %v1198 = vunpack.c.l.b16 %v982
    %v1199 = vunpack.c.l.b16 %v983
    %v1200 = vunpack.c.h.b16 %v983
    %v1201 = vunpack.c.l.b16 %v984
    %v1202 = vunpack.c.l.b16 %v985
    %v1203 = vunpack.c.h.b16 %v985
    %v1204 = vunpack.c.l.b16 %v986
    %v1205 = vunpack.c.l.b16 %v987
    %v1206 = vunpack.c.h.b16 %v987
    %v1207 = vunpack.c.l.b16 %v988
    %v1208 = vunpack.c.l.b16 %v989
    %v1209 = vunpack.c.h.b16 %v989
    %v1210 = vunpack.c.l.b16 %v990
    %v1211 = vunpack.c.l.b16 %v991
    %v1212 = vunpack.c.h.b16 %v991
    %v1213 = vunpack.c.l.b16 %v992
    %v1214 = vunpack.c.l.b16 %v993
    %v1215 = vunpack.c.h.b16 %v993
    %v1216 = vunpack.c.l.b16 %v994
    %v1217 = vunpack.c.l.b16 %v995
    %v1218 = vunpack.c.h.b16 %v995
    %v1219 = vunpack.c.l.b16 %v996
    %v1220 = vunpack.c.l.b16 %v997
    %v1221 = vunpack.c.h.b16 %v997
    %v1222 = vunpack.c.l.b16 %v998
    %v1223 = vunpack.c.l.b16 %v999
    %v1224 = vunpack.c.h.b16 %v999
    %v1225 = vunpack.c.l.b16 %v1000
    %v1226 = vunpack.c.l.b16 %v1001
    %v1227 = vunpack.c.h.b16 %v1001
    %v1228 = vunpack.c.l.b16 %v1002
    %v1229 = vunpack.c.l.b16 %v1003
    %v1230 = vunpack.c.h.b16 %v1003
    %v1231 = vunpack.c.l.b16 %v1004
    %v1232 = vunpack.c.l.b16 %v1005
    %v1233 = vunpack.c.h.b16 %v1005
    %v1234 = vunpack.c.l.b16 %v1006
    %v1235 = vunpack.c.l.b16 %v1007
    %v1236 = vunpack.c.h.b16 %v1007
    %v1237 = vunpack.c.l.b16 %v1008
    %v1238 = vunpack.c.l.b16 %v1009
    %v1239 = vunpack.c.h.b16 %v1009
    %v1240 = vunpack.c.l.b16 %v1010
    %v1241 = vunpack.c.l.b16 %v1011
    %v1242 = vunpack.c.h.b16 %v1011
    %v1243 = vunpack.c.l.b16 %v1012
    %v1244 = vunpack.c.l.b16 %v1013
    %v1245 = vunpack.c.h.b16 %v1013
    %v1246 = vunpack.c.l.b16 %v1014
    %v1247 = vunpack.c.l.b16 %v1015
    %v1248 = vunpack.c.h.b16 %v1015
    %v1249 = vunpack.c.l.b16 %v1016
    %v1250 = vunpack.c.l.b16 %v1017
    %v1251 = vunpack.c.h.b16 %v1017
    %v1252 = vunpack.c.l.b16 %v1018
    %v1253 = vunpack.c.l.b16 %v1019
    %v1254 = vunpack.c.h.b16 %v1019
    %v1255 = vunpack.c.l.b16 %v1020
    %v1256 = vunpack.c.l.b16 %v1021
    %v1257 = vunpack.c.h.b16 %v1021
    %v1258 = vunpack.c.l.b16 %v1022
    %v1259 = vunpack.c.l.b16 %v1023
    %v1260 = vunpack.c.h.b16 %v1023
    %v1261 = vunpack.c.l.b16 %v1024
    %v1262 = vunpack.c.l.b16 %v1025
    %v1263 = vunpack.c.h.b16 %v1025
    %v1264 = vunpack.c.l.b16 %v1026
    %v1265 = vunpack.c.l.b16 %v1027
    %v1266 = vunpack.c.h.b16 %v1027
    %v1267 = vunpack.c.l.b16 %v1028
    %v1268 = vunpack.c.l.b16 %v1029
    %v1269 = vunpack.c.h.b16 %v1029
    %v1270 = vunpack.c.l.b16 %v1030
    %v1271 = vunpack.c.l.b16 %v1031
    %v1272 = vunpack.c.h.b16 %v1031
    %v1273 = vunpack.c.l.b16 %v1032
    %v1274 = vunpack.c.l.b16 %v1033
    %v1275 = vunpack.c.h.b16 %v1033
    %v1276 = vunpack.c.l.b16 %v1034
    %v1277 = vunpack.c.l.b16 %v1035
    %v1278 = vunpack.c.h.b16 %v1035
    %v1279 = vunpack.c.l.b16 %v1036
    %v1280 = vunpack.c.l.b16 %v1037
    %v1281 = vunpack.c.h.b16 %v1037
    %v1282 = vunpack.c.l.b16 %v1038
    %v1283 = vunpack.c.l.b16 %v1039
    %v1284 = vunpack.c.h.b16 %v1039
    %v1285 = vunpack.c.l.b16 %v1040
    %v1286 = vunpack.c.l.b16 %v1041
    %v1287 = vunpack.c.h.b16 %v1041
    %v1288 = vunpack.c.l.b16 %v1042
    %v1289 = vunpack.c.l.b16 %v1043
    %v1290 = vunpack.c.h.b16 %v1043
    %v1291 = vunpack.c.l.b16 %v1044
    %v1292 = vunpack.c.l.b16 %v1045
    %v1293 = vunpack.c.h.b16 %v1045
    %v1294 = vunpack.c.l.b16 %v1046
    %v1295 = vunpack.c.l.b16 %v1047
    %v1296 = vunpack.c.h.b16 %v1047
    %v1297 = vunpack.c.l.b16 %v1048
    %v1298 = vunpack.c.l.b16 %v1049
    %v1299 = vunpack.c.h.b16 %v1049
    %v1300 = vunpack.c.l.b16 %v1050
    %v1301 = vunpack.c.l.b16 %v1051
    %v1302 = vunpack.c.h.b16 %v1051
    %v1303 = vunpack.c.l.b16 %v1052
    %v1304 = vunpack.c.l.b16 %v1053
    %v1305 = vunpack.c.h.b16 %v1053
    %v1306 = vunpack.c.l.b16 %v1054
    %v1307 = vunpack.c.l.b16 %v1055
    %v1308 = vunpack.c.h.b16 %v1055
    %v1309 = vunpack.c.l.b16 %v1056
    %v1310 = vunpack.c.l.b16 %v1057
    %v1311 = vunpack.c.h.b16 %v1057
    %v1312 = vunpack.c.l.b16 %v1058
    %v1313 = vunpack.c.l.b16 %v1059
    %v1314 = vunpack.c.h.b16 %v1059
    %v1315 = vunpack.c.l.b16 %v1060
    %v1316 = vunpack.c.l.b16 %v1061
    %v1317 = vunpack.c.h.b16 %v1061
    %v1318 = vunpack.c.l.b16 %v1062
    %v1319 = vpack.c.b16 %v1178, %v1175
    %v1320 = vpack.c.b16 %v1179, %v1176
    %v1321 = vpack.c.b16 %v1180, %v1177
    %v1322 = vpack.c.b16 %v1184, %v1181
    %v1323 = vpack.c.b16 %v1185, %v1182
    %v1324 = vpack.c.b16 %v1186, %v1183
    %v1325 = vpack.c.b16 %v1190, %v1187
    %v1326 = vpack.c.b16 %v1191, %v1188
    %v1327 = vpack.c.b16 %v1192, %v1189
    %v1328 = vpack.c.b16 %v1196, %v1193
    %v1329 = vpack.c.b16 %v1197, %v1194
    %v1330 = vpack.c.b16 %v1198, %v1195
    %v1331 = vpack.c.b16 %v1202, %v1199
    %v1332 = vpack.c.b16 %v1203, %v1200
    %v1333 = vpack.c.b16 %v1204, %v1201
    %v1334 = vpack.c.b16 %v1208, %v1205
    %v1335 = vpack.c.b16 %v1209, %v1206
    %v1336 = vpack.c.b16 %v1210, %v1207
    %v1337 = vpack.c.b16 %v1214, %v1211
    %v1338 = vpack.c.b16 %v1215, %v1212
    %v1339 = vpack.c.b16 %v1216, %v1213
    %v1340 = vpack.c.b16 %v1220, %v1217
    %v1341 = vpack.c.b16 %v1221, %v1218
    %v1342 = vpack.c.b16 %v1222, %v1219
    %v1343 = vpack.c.b16 %v1226, %v1223
    %v1344 = vpack.c.b16 %v1227, %v1224
    %v1345 = vpack.c.b16 %v1228, %v1225
    %v1346 = vpack.c.b16 %v1232, %v1229
    %v1347 = vpack.c.b16 %v1233, %v1230
    %v1348 = vpack.c.b16 %v1234, %v1231
    %v1349 = vpack.c.b16 %v1238, %v1235
    %v1350 = vpack.c.b16 %v1239, %v1236
    %v1351 = vpack.c.b16 %v1240, %v1237
    %v1352 = vpack.c.b16 %v1244, %v1241
    %v1353 = vpack.c.b16 %v1245, %v1242
    %v1354 = vpack.c.b16 %v1246, %v1243
    %v1355 = vpack.c.b16 %v1250, %v1247
    %v1356 = vpack.c.b16 %v1251, %v1248
    %v1357 = vpack.c.b16 %v1252, %v1249
    %v1358 = vpack.c.b16 %v1256, %v1253
    %v1359 = vpack.c.b16 %v1257, %v1254
    %v1360 = vpack.c.b16 %v1258, %v1255
    %v1361 = vpack.c.b16 %v1262, %v1259
    %v1362 = vpack.c.b16 %v1263, %v1260
    %v1363 = vpack.c.b16 %v1264, %v1261
    %v1364 = vpack.c.b16 %v1268, %v1265
    %v1365 = vpack.c.b16 %v1269, %v1266
    %v1366 = vpack.c.b16 %v1270, %v1267
    %v1367 = vpack.c.b16 %v1274, %v1271
    %v1368 = vpack.c.b16 %v1275, %v1272
    %v1369 = vpack.c.b16 %v1276, %v1273
    %v1370 = vpack.c.b16 %v1280, %v1277
    %v1371 = vpack.c.b16 %v1281, %v1278
    %v1372 = vpack.c.b16 %v1282, %v1279
    %v1373 = vpack.c.b16 %v1286, %v1283
    %v1374 = vpack.c.b16 %v1287, %v1284
    %v1375 = vpack.c.b16 %v1288, %v1285
    %v1376 = vpack.c.b16 %v1292, %v1289
    %v1377 = vpack.c.b16 %v1293, %v1290
    %v1378 = vpack.c.b16 %v1294, %v1291
    %v1379 = vpack.c.b16 %v1298, %v1295
    %v1380 = vpack.c.b16 %v1299, %v1296
    %v1381 = vpack.c.b16 %v1300, %v1297
    %v1382 = vpack.c.b16 %v1304, %v1301
    %v1383 = vpack.c.b16 %v1305, %v1302
    %v1384 = vpack.c.b16 %v1306, %v1303
    %v1385 = vpack.c.b16 %v1310, %v1307
    %v1386 = vpack.c.b16 %v1311, %v1308
    %v1387 = vpack.c.b16 %v1312, %v1309
    %v1388 = vpack.c.b16 %v1316, %v1313
    %v1389 = vpack.c.b16 %v1317, %v1314
    %v1390 = vpack.c.b16 %v1318, %v1315
    %1463 = vmatprep.subr.bf16.mxu0 %v1341
    %1464 = vmatpush1.bf16.msra.mxu0 %v1340
    %1465 = vmatprep.subr.bf16.mxu0 %v1338
    %1466 = vmatpush1.bf16.msra.mxu0 %v1337
    %1467 = vmatprep.subr.bf16.mxu0 %v1335
    %1468 = vmatpush1.bf16.msra.mxu0 %v1334
    %1469 = vmatprep.subr.bf16.mxu0 %v1332
    %1470 = vmatpush1.bf16.msra.mxu0 %v1331
    %1471 = vmatprep.subr.bf16.mxu0 %v1329
    %1472 = vmatpush1.bf16.msra.mxu0 %v1328
    %1473 = vmatprep.subr.bf16.mxu0 %v1326
    %1474 = vmatpush1.bf16.msra.mxu0 %v1325
    %1475 = vmatprep.subr.bf16.mxu0 %v1323
    %1476 = vmatpush1.bf16.msra.mxu0 %v1322
    %1477 = vmatprep.subr.bf16.mxu0 %v1320
    %1478 = vmatpush1.bf16.msra.mxu0 %v1319
    %1479 = vmatprep.subr.bf16.mxu0 %v1365
    %1480 = vmatpush2.bf16.msra.mxu0 %v1364
    %1481 = vmatprep.subr.bf16.mxu0 %v1362
    %1482 = vmatpush2.bf16.msra.mxu0 %v1361
    %1483 = vmatprep.subr.bf16.mxu0 %v1359
    %1484 = vmatpush2.bf16.msra.mxu0 %v1358
    %1485 = vmatprep.subr.bf16.mxu0 %v1356
    %1486 = vmatpush2.bf16.msra.mxu0 %v1355
    %1487 = vmatprep.subr.bf16.mxu0 %v1353
    %1488 = vmatpush2.bf16.msra.mxu0 %v1352
    %1489 = vmatprep.subr.bf16.mxu0 %v1350
    %1490 = vmatpush2.bf16.msra.mxu0 %v1349
    %1491 = vmatprep.subr.bf16.mxu0 %v1347
    %1492 = vmatpush2.bf16.msra.mxu0 %v1346
    %1493 = vmatprep.subr.bf16.mxu0 %v1344
    %1494 = vmatpush2.bf16.msra.mxu0 %v1343
    %1495 = vmatprep.mubr.bf16.mxu0 %v965
    %1496 = vmatmul.mubr.bf16.gmra.mxu0 %v964
    %v1497 = vpop.f32.mrf.mxu0
    %v1498 = vadd.f32 %v1067, %v1497
    %v1499 = vpop.f32.mrf.mxu0
    %v1500 = vadd.f32 %v1071, %v1499
    %v1501 = vpop.f32.mrf.mxu0
    %v1502 = vadd.f32 %v1067, %v1501
    %v1503 = vpop.f32.mrf.mxu0
    %v1504 = vadd.f32 %v1071, %v1503
    %1505 = vdwg.mxu0
    %1506 = vmatprep.subr.bf16.mxu0 %v1389
    %1507 = vmatpush1.bf16.msra.mxu0 %v1388
    %1508 = vmatprep.subr.bf16.mxu0 %v1386
    %1509 = vmatpush1.bf16.msra.mxu0 %v1385
    %1510 = vmatprep.subr.bf16.mxu0 %v1383
    %1511 = vmatpush1.bf16.msra.mxu0 %v1382
    %1512 = vmatprep.subr.bf16.mxu0 %v1380
    %1513 = vmatpush1.bf16.msra.mxu0 %v1379
    %1514 = vmatprep.subr.bf16.mxu0 %v1377
    %1515 = vmatpush1.bf16.msra.mxu0 %v1376
    %1516 = vmatprep.subr.bf16.mxu0 %v1374
    %1517 = vmatpush1.bf16.msra.mxu0 %v1373
    %1518 = vmatprep.subr.bf16.mxu0 %v1371
    %1519 = vmatpush1.bf16.msra.mxu0 %v1370
    %1520 = vmatprep.subr.bf16.mxu0 %v1368
    %1521 = vmatpush1.bf16.msra.mxu0 %v1367
    %1522 = vmatprep.subr.bf16.mxu0 0
    %1523 = vmatpush2.bf16.msra.mxu0 0
    %1524 = vmatprep.subr.bf16.mxu0 0
    %1525 = vmatpush2.bf16.msra.mxu0 0
    %1526 = vmatprep.subr.bf16.mxu0 0
    %1527 = vmatpush2.bf16.msra.mxu0 0
    %1528 = vmatprep.subr.bf16.mxu0 0
    %1529 = vmatpush2.bf16.msra.mxu0 0
    %1530 = vmatprep.subr.bf16.mxu0 0
    %1531 = vmatpush2.bf16.msra.mxu0 0
    %1532 = vmatprep.subr.bf16.mxu0 0
    %1533 = vmatpush2.bf16.msra.mxu0 0
    %1534 = vmatprep.subr.bf16.mxu0 0
    %1535 = vmatpush2.bf16.msra.mxu0 0
    %1536 = vmatprep.subr.bf16.mxu0 0
    %1537 = vmatpush2.bf16.msra.mxu0 0
    %1538 = vmatprep.mubr.bf16.mxu0 0
    %1539 = vmatmul.mubr.bf16.gmra.mxu0 %v966
    %v1540 = vpop.f32.mrf.mxu0
    %v1541 = vadd.f32 %v1498, %v1540
    %v1542 = vpop.f32.mrf.mxu0
    %v1543 = vadd.f32 %v1500, %v1542
    %v1544 = vpop.f32.mrf.mxu0
    %v1545 = vadd.f32 %v1502, %v1544
    %v1546 = vpop.f32.mrf.mxu0
    %v1547 = vadd.f32 %v1504, %v1546
    %1548 = vdwg.mxu0
    %1549 = vmatprep.subr.bf16.mxu0 0
    %1550 = vmatpush1.bf16.msra.mxu0 %v1342
    %1551 = vmatprep.subr.bf16.mxu0 0
    %1552 = vmatpush1.bf16.msra.mxu0 %v1339
    %1553 = vmatprep.subr.bf16.mxu0 0
    %1554 = vmatpush1.bf16.msra.mxu0 %v1336
    %1555 = vmatprep.subr.bf16.mxu0 0
    %1556 = vmatpush1.bf16.msra.mxu0 %v1333
    %1557 = vmatprep.subr.bf16.mxu0 0
    %1558 = vmatpush1.bf16.msra.mxu0 %v1330
    %1559 = vmatprep.subr.bf16.mxu0 0
    %1560 = vmatpush1.bf16.msra.mxu0 %v1327
    %1561 = vmatprep.subr.bf16.mxu0 0
    %1562 = vmatpush1.bf16.msra.mxu0 %v1324
    %1563 = vmatprep.subr.bf16.mxu0 0
    %1564 = vmatpush1.bf16.msra.mxu0 %v1321
    %1565 = vmatprep.subr.bf16.mxu0 0
    %1566 = vmatpush2.bf16.msra.mxu0 %v1366
    %1567 = vmatprep.subr.bf16.mxu0 0
    %1568 = vmatpush2.bf16.msra.mxu0 %v1363
    %1569 = vmatprep.subr.bf16.mxu0 0
    %1570 = vmatpush2.bf16.msra.mxu0 %v1360
    %1571 = vmatprep.subr.bf16.mxu0 0
    %1572 = vmatpush2.bf16.msra.mxu0 %v1357
    %1573 = vmatprep.subr.bf16.mxu0 0
    %1574 = vmatpush2.bf16.msra.mxu0 %v1354
    %1575 = vmatprep.subr.bf16.mxu0 0
    %1576 = vmatpush2.bf16.msra.mxu0 %v1351
    %1577 = vmatprep.subr.bf16.mxu0 0
    %1578 = vmatpush2.bf16.msra.mxu0 %v1348
    %1579 = vmatprep.subr.bf16.mxu0 0
    %1580 = vmatpush2.bf16.msra.mxu0 %v1345
    %1581 = vmatprep.mubr.bf16.mxu0 %v965
    %1582 = vmatmul.mubr.bf16.gmra.mxu0 %v964
    %v1583 = vpop.f32.mrf.mxu0
    %v1584 = vadd.f32 %v1075, %v1583
    %v1585 = vpop.f32.mrf.mxu0
    %v1586 = vpop.f32.mrf.mxu0
    %v1587 = vadd.f32 %v1075, %v1586
    %v1588 = vpop.f32.mrf.mxu0
    %1589 = vdwg.mxu0
    %1590 = vmatprep.subr.bf16.mxu0 0
    %1591 = vmatpush1.bf16.msra.mxu0 %v1390
    %1592 = vmatprep.subr.bf16.mxu0 0
    %1593 = vmatpush1.bf16.msra.mxu0 %v1387
    %1594 = vmatprep.subr.bf16.mxu0 0
    %1595 = vmatpush1.bf16.msra.mxu0 %v1384
    %1596 = vmatprep.subr.bf16.mxu0 0
    %1597 = vmatpush1.bf16.msra.mxu0 %v1381
    %1598 = vmatprep.subr.bf16.mxu0 0
    %1599 = vmatpush1.bf16.msra.mxu0 %v1378
    %1600 = vmatprep.subr.bf16.mxu0 0
    %1601 = vmatpush1.bf16.msra.mxu0 %v1375
    %1602 = vmatprep.subr.bf16.mxu0 0
    %1603 = vmatpush1.bf16.msra.mxu0 %v1372
    %1604 = vmatprep.subr.bf16.mxu0 0
    %1605 = vmatpush1.bf16.msra.mxu0 %v1369
    %1606 = vmatprep.subr.bf16.mxu0 0
    %1607 = vmatpush2.bf16.msra.mxu0 0
    %1608 = vmatprep.subr.bf16.mxu0 0
    %1609 = vmatpush2.bf16.msra.mxu0 0
    %1610 = vmatprep.subr.bf16.mxu0 0
    %1611 = vmatpush2.bf16.msra.mxu0 0
    %1612 = vmatprep.subr.bf16.mxu0 0
    %1613 = vmatpush2.bf16.msra.mxu0 0
    %1614 = vmatprep.subr.bf16.mxu0 0
    %1615 = vmatpush2.bf16.msra.mxu0 0
    %1616 = vmatprep.subr.bf16.mxu0 0
    %1617 = vmatpush2.bf16.msra.mxu0 0
    %1618 = vmatprep.subr.bf16.mxu0 0
    %1619 = vmatpush2.bf16.msra.mxu0 0
    %1620 = vmatprep.subr.bf16.mxu0 0
    %1621 = vmatpush2.bf16.msra.mxu0 0
    %1622 = vmatprep.mubr.bf16.mxu0 0
    %1623 = vmatmul.mubr.bf16.gmra.mxu0 %v966
    %v1624 = vpop.f32.mrf.mxu0
    %v1625 = vadd.f32 %v1584, %v1624
    %v1626 = vpop.f32.mrf.mxu0
    %v1627 = vpop.f32.mrf.mxu0
    %v1628 = vadd.f32 %v1587, %v1627
    %v1629 = vpop.f32.mrf.mxu0
    %1630 = vdwg.mxu0
    %vm1631 = vcmp.gt.f32.partialorder %v1541, 0.0
    %vm1632 = vcmp.gt.f32.partialorder %v1543, 0.0
    %vm1633 = vcmp.gt.f32.partialorder %v1625, 0.0
    %vm1634 = vcmp.gt.f32.partialorder %v1545, 0.0
    %vm1635 = vcmp.gt.f32.partialorder %v1547, 0.0
    %vm1636 = vcmp.gt.f32.partialorder %v1628, 0.0
    %v1637 = vmul.f32 %v1541, 0.01
    %v1638 = vmul.f32 %v1543, 0.01
    %v1639 = vmul.f32 %v1625, 0.01
    %v1640 = vmul.f32 %v1545, 0.01
    %v1641 = vmul.f32 %v1547, 0.01
    %v1642 = vmul.f32 %v1628, 0.01
    %v1643 = vsel %vm1631, %v1541, %v1637
    %v1644 = vsel %vm1632, %v1543, %v1638
    %v1645 = vsel %vm1633, %v1625, %v1639
    %v1646 = vsel %vm1634, %v1545, %v1640
    %v1647 = vsel %vm1635, %v1547, %v1641
    %v1648 = vsel %vm1636, %v1628, %v1642
    %v1649 = vadd.f32 %v1643, %v1646
    %v1650 = vrot.slane %v1649, 4
    %v1651 = vadd.f32 %v1649, %v1650
    %v1652 = vrot.slane %v1651, 2
    %v1653 = vadd.f32 %v1651, %v1652
    %v1654 = vrot.slane %v1653, 1
    %v1655 = vadd.f32 %v1653, %v1654
    %v1656 = vadd.f32 %v1644, %v1647
    %v1657 = vrot.slane %v1656, 4
    %v1658 = vadd.f32 %v1656, %v1657
    %v1659 = vrot.slane %v1658, 2
    %v1660 = vadd.f32 %v1658, %v1659
    %v1661 = vrot.slane %v1660, 1
    %v1662 = vadd.f32 %v1660, %v1661
    %v1663 = vadd.f32 %v1645, %v1648
    %v1664 = vrot.slane %v1663, 4
    %v1665 = vadd.f32 %v1663, %v1664
    %v1666 = vrot.slane %v1665, 2
    %v1667 = vadd.f32 %v1665, %v1666
    %v1668 = vrot.slane %v1667, 1
    %v1669 = vadd.f32 %v1667, %v1668
    %v1670 = vmul.f32 %v1643, %v1643
    %v1671 = vmul.f32 %v1644, %v1644
    %v1672 = vmul.f32 %v1645, %v1645
    %v1673 = vmul.f32 %v1646, %v1646
    %v1674 = vmul.f32 %v1647, %v1647
    %v1675 = vmul.f32 %v1648, %v1648
    %v1676 = vadd.f32 %v1670, %v1673
    %v1677 = vrot.slane %v1676, 4
    %v1678 = vadd.f32 %v1676, %v1677
    %v1679 = vrot.slane %v1678, 2
    %v1680 = vadd.f32 %v1678, %v1679
    %v1681 = vrot.slane %v1680, 1
    %v1682 = vadd.f32 %v1680, %v1681
    %v1683 = vadd.f32 %v1671, %v1674
    %v1684 = vrot.slane %v1683, 4
    %v1685 = vadd.f32 %v1683, %v1684
    %v1686 = vrot.slane %v1685, 2
    %v1687 = vadd.f32 %v1685, %v1686
    %v1688 = vrot.slane %v1687, 1
    %v1689 = vadd.f32 %v1687, %v1688
    %v1690 = vadd.f32 %v1672, %v1675
    %v1691 = vrot.slane %v1690, 4
    %v1692 = vadd.f32 %v1690, %v1691
    %v1693 = vrot.slane %v1692, 2
    %v1694 = vadd.f32 %v1692, %v1693
    %v1695 = vrot.slane %v1694, 1
    %v1696 = vadd.f32 %v1694, %v1695
    %v1697 = vmul.f32 %v1655, 0.0625
    %v1698 = vmul.f32 %v1662, 0.0625
    %v1699 = vmul.f32 %v1669, 0.0625
    %v1700 = vmul.f32 %v1682, 0.0625
    %v1701 = vmul.f32 %v1689, 0.0625
    %v1702 = vmul.f32 %v1696, 0.0625
    %v1703 = vmul.f32 %v1697, %v1697
    %v1704 = vmul.f32 %v1698, %v1698
    %v1705 = vmul.f32 %v1699, %v1699
    %v1706 = vsub.f32 %v1700, %v1703
    %v1707 = vsub.f32 %v1701, %v1704
    %v1708 = vsub.f32 %v1702, %v1705
    %v1709 = vadd.f32 %v1706, 1e-05
    %v1710 = vadd.f32 %v1707, 1e-05
    %v1711 = vadd.f32 %v1708, 1e-05
    %v1712 = vrsqrt.pop %v1709
    %v1713 = vrsqrt.pop %v1710
    %v1714 = vrsqrt.pop %v1711
    %v1718 = vcombine.low %v1712, %v1713
    %v1720 = vunpack.c.l.s4 1966171168
    %v1721 = vunpack.c.0.s8 %v1720
    %v1722 = vlaneseq
    %v1723 = vshrl.u32 %v1722, 7
    %v1724 = vsub.s32 %v1721, %v1723
    %v1725 = vrot.slane %v1718, %v1724
    %v1727 = vunpack.c.l.s4 1966171168
    %v1728 = vunpack.c.0.s8 %v1727
    %v1729 = vlaneseq
    %v1730 = vshrl.u32 %v1729, 7
    %v1731 = vsub.s32 %v1728, %v1730
    %v1732 = vrot.slane %v1714, %v1731
    %v1733 = vcombine.low %v1725, %v1732
    %v1735 = vunpack.c.l.s4 1966171168
    %v1736 = vunpack.c.0.s8 %v1735
    %v1737 = vlaneseq
    %v1738 = vshrl.u32 %v1737, 7
    %v1739 = vsub.s32 %v1736, %v1738
    %v1740 = vrot.slane %v1733, %v1739
    %v1742 = vmul.f32 %v100, %v1740
    %v1744 = vlaneseq
    %v1745 = vshrl.u32 %v1744, 7
    %v1746 = vsub.s32 0, %v1745
    %v1747 = vrot.slane %v1742, %v1746
    %v1748 = vlaneseq
    %v1749 = vshrl.u32 %v1748, 7
    %v1750 = vsub.s32 1, %v1749
    %v1751 = vrot.slane %v1742, %v1750
    %v1752 = vlaneseq
    %v1753 = vshrl.u32 %v1752, 7
    %v1754 = vsub.s32 2, %v1753
    %v1755 = vrot.slane %v1742, %v1754
    %v1759 = vmul.f32 %v1697, %v1747
    %v1760 = vmul.f32 %v1698, %v1751
    %v1761 = vmul.f32 %v1699, %v1755
    %v1765 = vcombine.low %v1759, %v1760
    %v1767 = vunpack.c.l.s4 1966171168
    %v1768 = vunpack.c.0.s8 %v1767
    %v1769 = vlaneseq
    %v1770 = vshrl.u32 %v1769, 7
    %v1771 = vsub.s32 %v1768, %v1770
    %v1772 = vrot.slane %v1765, %v1771
    %v1774 = vunpack.c.l.s4 1966171168
    %v1775 = vunpack.c.0.s8 %v1774
    %v1776 = vlaneseq
    %v1777 = vshrl.u32 %v1776, 7
    %v1778 = vsub.s32 %v1775, %v1777
    %v1779 = vrot.slane %v1761, %v1778
    %v1780 = vcombine.low %v1772, %v1779
    %v1782 = vunpack.c.l.s4 1966171168
    %v1783 = vunpack.c.0.s8 %v1782
    %v1784 = vlaneseq
    %v1785 = vshrl.u32 %v1784, 7
    %v1786 = vsub.s32 %v1783, %v1785
    %v1787 = vrot.slane %v1780, %v1786
    %v1789 = vsub.f32 %v102, %v1787
    %v1790 = vmul.f32 %v1643, %v1747
    %v1791 = vmul.f32 %v1644, %v1751
    %v1792 = vmul.f32 %v1645, %v1755
    %v1793 = vmul.f32 %v1646, %v1747
    %v1794 = vmul.f32 %v1647, %v1751
    %v1795 = vmul.f32 %v1648, %v1755
    %v1797 = vlaneseq
    %v1798 = vshrl.u32 %v1797, 7
    %v1799 = vsub.s32 0, %v1798
    %v1800 = vrot.slane %v1789, %v1799
    %v1801 = vlaneseq
    %v1802 = vshrl.u32 %v1801, 7
    %v1803 = vsub.s32 1, %v1802
    %v1804 = vrot.slane %v1789, %v1803
    %v1805 = vlaneseq
    %v1806 = vshrl.u32 %v1805, 7
    %v1807 = vsub.s32 2, %v1806
    %v1808 = vrot.slane %v1789, %v1807
    %v1812 = vadd.f32 %v1790, %v1800
    %v1813 = vadd.f32 %v1791, %v1804
    %v1814 = vadd.f32 %v1792, %v1808
    %v1815 = vadd.f32 %v1793, %v1800
    %v1816 = vadd.f32 %v1794, %v1804
    %v1817 = vadd.f32 %v1795, %v1808
    %s1818 = sld [smem:[#allocation2]]
    %v1819 = vlaneseq
    %v1820 = vshrl.u32 %v1819, 7
    %v1821 = vadd.s32 %v1820, 8
    %v1822 = vlaneseq
    %v1823 = vand.u32 %v1822, 127
    %v1824 = vadd.s32 %v1823, 128
    %v1825 = vadd.s32 %v1823, 256
    %v1826 = vmul.u32 %v1820, 384
    %v1827 = vmul.u32 %v1821, 384
    %v1828 = vadd.s32 %v1826, %v1823
    %v1829 = vadd.s32 %v1826, %v1824
    %v1830 = vadd.s32 %v1826, %v1825
    %v1831 = vadd.s32 %v1827, %v1823
    %v1832 = vadd.s32 %v1827, %v1824
    %v1833 = vadd.s32 %v1827, %v1825
    %s1834 = smul.u32 %s1818, 2654435769
    %v1835 = vstv %s1834
    %v1836 = vadd.s32 %v1828, %v1835
    %v1837 = vadd.s32 %v1829, %v1835
    %v1838 = vadd.s32 %v1830, %v1835
    %v1839 = vadd.s32 %v1831, %v1835
    %v1840 = vadd.s32 %v1832, %v1835
    %v1841 = vadd.s32 %v1833, %v1835
    %v1842 = vshrl.u32 %v1836, 16
    %v1843 = vshrl.u32 %v1837, 16
    %v1844 = vshrl.u32 %v1838, 16
    %v1845 = vshrl.u32 %v1839, 16
    %v1846 = vshrl.u32 %v1840, 16
    %v1847 = vshrl.u32 %v1841, 16
    %v1848 = vxor.u32 %v1836, %v1842
    %v1849 = vxor.u32 %v1837, %v1843
    %v1850 = vxor.u32 %v1838, %v1844
    %v1851 = vxor.u32 %v1839, %v1845
    %v1852 = vxor.u32 %v1840, %v1846
    %v1853 = vxor.u32 %v1841, %v1847
    %v1854 = vmul.u32 %v1848, 2246822507
    %v1855 = vmul.u32 %v1849, 2246822507
    %v1856 = vmul.u32 %v1850, 2246822507
    %v1857 = vmul.u32 %v1851, 2246822507
    %v1858 = vmul.u32 %v1852, 2246822507
    %v1859 = vmul.u32 %v1853, 2246822507
    %v1860 = vshrl.u32 %v1854, 13
    %v1861 = vshrl.u32 %v1855, 13
    %v1862 = vshrl.u32 %v1856, 13
    %v1863 = vshrl.u32 %v1857, 13
    %v1864 = vshrl.u32 %v1858, 13
    %v1865 = vshrl.u32 %v1859, 13
    %v1866 = vxor.u32 %v1854, %v1860
    %v1867 = vxor.u32 %v1855, %v1861
    %v1868 = vxor.u32 %v1856, %v1862
    %v1869 = vxor.u32 %v1857, %v1863
    %v1870 = vxor.u32 %v1858, %v1864
    %v1871 = vxor.u32 %v1859, %v1865
    %v1872 = vmul.u32 %v1866, 3266489909
    %v1873 = vmul.u32 %v1867, 3266489909
    %v1874 = vmul.u32 %v1868, 3266489909
    %v1875 = vmul.u32 %v1869, 3266489909
    %v1876 = vmul.u32 %v1870, 3266489909
    %v1877 = vmul.u32 %v1871, 3266489909
    %v1878 = vshrl.u32 %v1872, 16
    %v1879 = vshrl.u32 %v1873, 16
    %v1880 = vshrl.u32 %v1874, 16
    %v1881 = vshrl.u32 %v1875, 16
    %v1882 = vshrl.u32 %v1876, 16
    %v1883 = vshrl.u32 %v1877, 16
    %v1884 = vxor.u32 %v1872, %v1878
    %v1885 = vxor.u32 %v1873, %v1879
    %v1886 = vxor.u32 %v1874, %v1880
    %v1887 = vxor.u32 %v1875, %v1881
    %v1888 = vxor.u32 %v1876, %v1882
    %v1889 = vxor.u32 %v1877, %v1883
    %vm1890 = vcmp.ge.u32.totalorder %v1884, 858993459
    %vm1891 = vcmp.ge.u32.totalorder %v1885, 858993459
    %vm1892 = vcmp.ge.u32.totalorder %v1886, 858993459
    %vm1893 = vcmp.ge.u32.totalorder %v1887, 858993459
    %vm1894 = vcmp.ge.u32.totalorder %v1888, 858993459
    %vm1895 = vcmp.ge.u32.totalorder %v1889, 858993459
    %v1896 = vmul.f32 %v1812, 1.25
    %v1897 = vmul.f32 %v1813, 1.25
    %v1898 = vmul.f32 %v1814, 1.25
    %v1899 = vmul.f32 %v1815, 1.25
    %v1900 = vmul.f32 %v1816, 1.25
    %v1901 = vmul.f32 %v1817, 1.25
    %v1902 = vsel %vm1890, %v1896, 0.0
    %v1903 = vsel %vm1891, %v1897, 0.0
    %v1904 = vsel %vm1892, %v1898, 0.0
    %v1905 = vsel %vm1893, %v1899, 0.0
    %v1906 = vsel %vm1894, %v1900, 0.0
    %v1907 = vsel %vm1895, %v1901, 0.0
    %v1908 = vpack.c.bf16 %v1905, %v1902
    %v1909 = vpack.c.bf16 %v1906, %v1903
    %v1910 = vpack.c.bf16 %v1907, %v1904
    %v1911 = vld [vmem:[#allocation9] sm:$0xf]
    %v1912 = vld [vmem:[#allocation9 + $0x4] sm:$0xf]
    %v1913 = vld [vmem:[#allocation9 + $0x8] sm:$0xf]
    %v1914 = vld [vmem:[#allocation9 + $0xc] sm:$0xf]
    %v1915 = vld [vmem:[#allocation9 + $0x10] sm:$0xf]
    %v1916 = vld [vmem:[#allocation9 + $0x14] sm:$0xf]
    %v1917 = vld [vmem:[#allocation9 + $0x18] sm:$0xf]
    %v1918 = vld [vmem:[#allocation9 + $0x1c] sm:$0xf]
    %v1919 = vld [vmem:[#allocation9 + $0x20] sm:$0xf]
    %v1920 = vld [vmem:[#allocation9 + $0x24] sm:$0xf]
    %v1921 = vld [vmem:[#allocation9 + $0x28] sm:$0xf]
    %v1922 = vld [vmem:[#allocation9 + $0x2c] sm:$0xf]
    %v1923 = vld [vmem:[#allocation9 + $0x30] sm:$0xf]
    %v1924 = vld [vmem:[#allocation9 + $0x34] sm:$0xf]
    %v1925 = vld [vmem:[#allocation9 + $0x38] sm:$0xf]
    %v1926 = vld [vmem:[#allocation9 + $0x3c] sm:$0xf]
    %v1927 = vld [vmem:[#allocation9 + $0x40] sm:$0xf]
    %v1928 = vld [vmem:[#allocation9 + $0x44] sm:$0xf]
    %v1929 = vld [vmem:[#allocation9 + $0x48] sm:$0xf]
    %v1930 = vld [vmem:[#allocation9 + $0x4c] sm:$0xf]
    %v1931 = vld [vmem:[#allocation9 + $0x50] sm:$0xf]
    %v1932 = vld [vmem:[#allocation9 + $0x54] sm:$0xf]
    %v1933 = vld [vmem:[#allocation9 + $0x58] sm:$0xf]
    %v1934 = vld [vmem:[#allocation9 + $0x5c] sm:$0xf]
    %v1935 = vld [vmem:[#allocation9 + $0x60] sm:$0xf]
    %v1936 = vld [vmem:[#allocation9 + $0x64] sm:$0xf]
    %v1937 = vld [vmem:[#allocation9 + $0x68] sm:$0xf]
    %v1938 = vld [vmem:[#allocation9 + $0x6c] sm:$0xf]
    %v1939 = vld [vmem:[#allocation9 + $0x70] sm:$0xf]
    %v1940 = vld [vmem:[#allocation9 + $0x74] sm:$0xf]
    %v1941 = vld [vmem:[#allocation9 + $0x78] sm:$0xf]
    %v1942 = vld [vmem:[#allocation9 + $0x7c] sm:$0xf]
    %v1943 = vld [vmem:[#allocation9 + $0x80] sm:$0xf]
    %v1944 = vld [vmem:[#allocation9 + $0x84] sm:$0xf]
    %v1945 = vld [vmem:[#allocation9 + $0x88] sm:$0xf]
    %v1946 = vld [vmem:[#allocation9 + $0x8c] sm:$0xf]
    %v1947 = vld [vmem:[#allocation9 + $0x90] sm:$0xf]
    %v1948 = vld [vmem:[#allocation9 + $0x94] sm:$0xf]
    %v1949 = vld [vmem:[#allocation9 + $0x98] sm:$0xf]
    %v1950 = vld [vmem:[#allocation9 + $0x9c] sm:$0xf]
    %v1951 = vld [vmem:[#allocation9 + $0xa0] sm:$0xf]
    %v1952 = vld [vmem:[#allocation9 + $0xa4] sm:$0xf]
    %v1953 = vld [vmem:[#allocation9 + $0xa8] sm:$0xf]
    %v1954 = vld [vmem:[#allocation9 + $0xac] sm:$0xf]
    %v1955 = vld [vmem:[#allocation9 + $0xb0] sm:$0xf]
    %v1956 = vld [vmem:[#allocation9 + $0xb4] sm:$0xf]
    %v1957 = vld [vmem:[#allocation9 + $0xb8] sm:$0xf]
    %v1958 = vld [vmem:[#allocation9 + $0xbc] sm:$0xf]
    %v2007 = vunpack.c.l.b16 %v1911
    %v2008 = vunpack.c.l.b16 %v1912
    %v2009 = vunpack.c.l.b16 %v1913
    %v2010 = vunpack.c.l.b16 %v1914
    %v2011 = vunpack.c.l.b16 %v1915
    %v2012 = vunpack.c.l.b16 %v1916
    %v2013 = vunpack.c.l.b16 %v1917
    %v2014 = vunpack.c.l.b16 %v1918
    %v2015 = vunpack.c.l.b16 %v1919
    %v2016 = vunpack.c.l.b16 %v1920
    %v2017 = vunpack.c.l.b16 %v1921
    %v2018 = vunpack.c.l.b16 %v1922
    %v2019 = vunpack.c.l.b16 %v1923
    %v2020 = vunpack.c.l.b16 %v1924
    %v2021 = vunpack.c.l.b16 %v1925
    %v2022 = vunpack.c.l.b16 %v1926
    %v2023 = vunpack.c.l.b16 %v1927
    %v2024 = vunpack.c.l.b16 %v1928
    %v2025 = vunpack.c.l.b16 %v1929
    %v2026 = vunpack.c.l.b16 %v1930
    %v2027 = vunpack.c.l.b16 %v1931
    %v2028 = vunpack.c.l.b16 %v1932
    %v2029 = vunpack.c.l.b16 %v1933
    %v2030 = vunpack.c.l.b16 %v1934
    %v2031 = vunpack.c.l.b16 %v1935
    %v2032 = vunpack.c.l.b16 %v1936
    %v2033 = vunpack.c.l.b16 %v1937
    %v2034 = vunpack.c.l.b16 %v1938
    %v2035 = vunpack.c.l.b16 %v1939
    %v2036 = vunpack.c.l.b16 %v1940
    %v2037 = vunpack.c.l.b16 %v1941
    %v2038 = vunpack.c.l.b16 %v1942
    %v2039 = vunpack.c.l.b16 %v1943
    %v2040 = vunpack.c.l.b16 %v1944
    %v2041 = vunpack.c.l.b16 %v1945
    %v2042 = vunpack.c.l.b16 %v1946
    %v2043 = vunpack.c.l.b16 %v1947
    %v2044 = vunpack.c.l.b16 %v1948
    %v2045 = vunpack.c.l.b16 %v1949
    %v2046 = vunpack.c.l.b16 %v1950
    %v2047 = vunpack.c.l.b16 %v1951
    %v2048 = vunpack.c.l.b16 %v1952
    %v2049 = vunpack.c.l.b16 %v1953
    %v2050 = vunpack.c.l.b16 %v1954
    %v2051 = vunpack.c.l.b16 %v1955
    %v2052 = vunpack.c.l.b16 %v1956
    %v2053 = vunpack.c.l.b16 %v1957
    %v2054 = vunpack.c.l.b16 %v1958
    %v2055 = vpack.c.b16 %v2008, %v2007
    %v2056 = vpack.c.b16 %v2010, %v2009
    %v2057 = vpack.c.b16 %v2012, %v2011
    %v2058 = vpack.c.b16 %v2014, %v2013
    %v2059 = vpack.c.b16 %v2016, %v2015
    %v2060 = vpack.c.b16 %v2018, %v2017
    %v2061 = vpack.c.b16 %v2020, %v2019
    %v2062 = vpack.c.b16 %v2022, %v2021
    %v2063 = vpack.c.b16 %v2024, %v2023
    %v2064 = vpack.c.b16 %v2026, %v2025
    %v2065 = vpack.c.b16 %v2028, %v2027
    %v2066 = vpack.c.b16 %v2030, %v2029
    %v2067 = vpack.c.b16 %v2032, %v2031
    %v2068 = vpack.c.b16 %v2034, %v2033
    %v2069 = vpack.c.b16 %v2036, %v2035
    %v2070 = vpack.c.b16 %v2038, %v2037
    %v2071 = vpack.c.b16 %v2040, %v2039
    %v2072 = vpack.c.b16 %v2042, %v2041
    %v2073 = vpack.c.b16 %v2044, %v2043
    %v2074 = vpack.c.b16 %v2046, %v2045
    %v2075 = vpack.c.b16 %v2048, %v2047
    %v2076 = vpack.c.b16 %v2050, %v2049
    %v2077 = vpack.c.b16 %v2052, %v2051
    %v2078 = vpack.c.b16 %v2054, %v2053
    %2103 = vmatprep.subr.bf16.mxu0 0
    %2104 = vmatpush1.bf16.msra.mxu0 %v2062
    %2105 = vmatprep.subr.bf16.mxu0 0
    %2106 = vmatpush1.bf16.msra.mxu0 %v2061
    %2107 = vmatprep.subr.bf16.mxu0 0
    %2108 = vmatpush1.bf16.msra.mxu0 %v2060
    %2109 = vmatprep.subr.bf16.mxu0 0
    %2110 = vmatpush1.bf16.msra.mxu0 %v2059
    %2111 = vmatprep.subr.bf16.mxu0 0
    %2112 = vmatpush1.bf16.msra.mxu0 %v2058
    %2113 = vmatprep.subr.bf16.mxu0 0
    %2114 = vmatpush1.bf16.msra.mxu0 %v2057
    %2115 = vmatprep.subr.bf16.mxu0 0
    %2116 = vmatpush1.bf16.msra.mxu0 %v2056
    %2117 = vmatprep.subr.bf16.mxu0 0
    %2118 = vmatpush1.bf16.msra.mxu0 %v2055
    %2119 = vmatprep.subr.bf16.mxu0 0
    %2120 = vmatpush2.bf16.msra.mxu0 %v2070
    %2121 = vmatprep.subr.bf16.mxu0 0
    %2122 = vmatpush2.bf16.msra.mxu0 %v2069
    %2123 = vmatprep.subr.bf16.mxu0 0
    %2124 = vmatpush2.bf16.msra.mxu0 %v2068
    %2125 = vmatprep.subr.bf16.mxu0 0
    %2126 = vmatpush2.bf16.msra.mxu0 %v2067
    %2127 = vmatprep.subr.bf16.mxu0 0
    %2128 = vmatpush2.bf16.msra.mxu0 %v2066
    %2129 = vmatprep.subr.bf16.mxu0 0
    %2130 = vmatpush2.bf16.msra.mxu0 %v2065
    %2131 = vmatprep.subr.bf16.mxu0 0
    %2132 = vmatpush2.bf16.msra.mxu0 %v2064
    %2133 = vmatprep.subr.bf16.mxu0 0
    %2134 = vmatpush2.bf16.msra.mxu0 %v2063
    %2135 = vmatprep.mubr.bf16.mxu0 %v1909
    %2136 = vmatmul.mubr.bf16.gmra.mxu0 %v1908
    %v2137 = vpop.f32.mrf.mxu0
    %v2138 = vadd.f32 %v103, %v2137
    %v2139 = vpop.f32.mrf.mxu0
    %v2140 = vpop.f32.mrf.mxu0
    %v2141 = vadd.f32 %v103, %v2140
    %v2142 = vpop.f32.mrf.mxu0
    %2143 = vdwg.mxu0
    %2144 = vmatprep.subr.bf16.mxu0 0
    %2145 = vmatpush1.bf16.msra.mxu0 %v2078
    %2146 = vmatprep.subr.bf16.mxu0 0
    %2147 = vmatpush1.bf16.msra.mxu0 %v2077
    %2148 = vmatprep.subr.bf16.mxu0 0
    %2149 = vmatpush1.bf16.msra.mxu0 %v2076
    %2150 = vmatprep.subr.bf16.mxu0 0
    %2151 = vmatpush1.bf16.msra.mxu0 %v2075
    %2152 = vmatprep.subr.bf16.mxu0 0
    %2153 = vmatpush1.bf16.msra.mxu0 %v2074
    %2154 = vmatprep.subr.bf16.mxu0 0
    %2155 = vmatpush1.bf16.msra.mxu0 %v2073
    %2156 = vmatprep.subr.bf16.mxu0 0
    %2157 = vmatpush1.bf16.msra.mxu0 %v2072
    %2158 = vmatprep.subr.bf16.mxu0 0
    %2159 = vmatpush1.bf16.msra.mxu0 %v2071
    %2160 = vmatprep.subr.bf16.mxu0 0
    %2161 = vmatpush2.bf16.msra.mxu0 0
    %2162 = vmatprep.subr.bf16.mxu0 0
    %2163 = vmatpush2.bf16.msra.mxu0 0
    %2164 = vmatprep.subr.bf16.mxu0 0
    %2165 = vmatpush2.bf16.msra.mxu0 0
    %2166 = vmatprep.subr.bf16.mxu0 0
    %2167 = vmatpush2.bf16.msra.mxu0 0
    %2168 = vmatprep.subr.bf16.mxu0 0
    %2169 = vmatpush2.bf16.msra.mxu0 0
    %2170 = vmatprep.subr.bf16.mxu0 0
    %2171 = vmatpush2.bf16.msra.mxu0 0
    %2172 = vmatprep.subr.bf16.mxu0 0
    %2173 = vmatpush2.bf16.msra.mxu0 0
    %2174 = vmatprep.subr.bf16.mxu0 0
    %2175 = vmatpush2.bf16.msra.mxu0 0
    %2176 = vmatprep.mubr.bf16.mxu0 0
    %2177 = vmatmul.mubr.bf16.gmra.mxu0 %v1910
    %v2178 = vpop.f32.mrf.mxu0
    %v2179 = vadd.f32 %v2138, %v2178
    %v2180 = vpop.f32.mrf.mxu0
    %v2181 = vpop.f32.mrf.mxu0
    %v2182 = vadd.f32 %v2141, %v2181
    %v2183 = vpop.f32.mrf.mxu0
    %2184 = vdwg.mxu0
    %2185 = vst [vmem:[#allocation12] sm:$0xff] %v2179
    %2186 = vst [vmem:[#allocation12 + $0x8] sm:$0xff] %v2182
    // Predicated region
    $region46: #{tpu_custom_call.1} parent=1 // pred_check
      _
    $region47: #{tpu_custom_call.1} parent=1 // pred_check_branch
      %2188 = sbr.rel (0) target = $region49
    $region48: #{tpu_custom_call.1} parent=1 // pred_region
      %s2190 = ssub.s32 256, 256
      %2191 = vsyncadd [#allocation5], %s2190
      %s2192 = sshll.u32 [#allocation12], 4
      %s2193 = int_to_ptr.vmem [resolvable:$true] %s2192
      %2198 = dma.vmem_to_hbm [thread:$0]  %s2193, 256, %s6, [#allocation5], 128, 128, 8
    $region49: #{tpu_custom_call.1} parent=1 // pred_fallthru
      _
    // Predicated region
    $region50: #{tpu_custom_call.1} parent=1 // pred_check
      _
    $region51: #{tpu_custom_call.1} parent=1 // pred_check_branch
      %2200 = sbr.rel (0) target = $region53
    $region52: #{tpu_custom_call.1} parent=1 // pred_region
      %2201 = dma.done [#allocation5], 256
    $region53: #{tpu_custom_call.1} parent=1 // pred_fallthru
      _
    %2202 = vsyncpa [#allocation4], 1
    %2203 = vsyncpa [#allocation7], 1
    %2204 = vsyncpa [#allocation10], 1
    %2205 = vsyncpa [#allocation5], 1

</llo_original>
